<compile_context>
chip_gen: v7x
topology: tpu7x:2x2x1
jax: 0.10.0
libtpu: 0.0.40
codegen_flags: <defaults>
</compile_context>

<pallas_src>
import functools

import jax
import jax.numpy as jnp
from jax import lax
from jax.experimental import pallas as pl
from jax.experimental.pallas import tpu as pltpu


# --------------------------------------------------------------------------- #
# Fused kernel: qkv linear -> head-batched softmax attention -> output proj
# --------------------------------------------------------------------------- #
def _fused_attention_kernel(x_ref, w_qkv_ref, w_proj_ref, b_proj_ref, o_ref,
                            *, num_heads, mxu_dtype):
    # x_ref:      (B_TILE, N, C)   batch tile, lane-dense in C
    # w_qkv_ref:  (C, 3C)          resident weight (q columns pre-scaled)
    # w_proj_ref: (C, C)           resident weight
    # b_proj_ref: (1, C)           resident bias (f32)
    # o_ref:      (B_TILE, N, C)
    Bt, N, C = x_ref.shape
    H = num_heads
    Dh = C // H

    # (1) qkv projection: flatten the batch tile into MXU rows -> one wide matmul.
    x2 = x_ref[...].reshape(Bt * N, C).astype(mxu_dtype)        # (Bt*N, C)
    qkv = jnp.dot(x2, w_qkv_ref[...],
                  preferred_element_type=jnp.float32)           # (Bt*N, 3C) f32
    qkv = qkv.astype(mxu_dtype)                                 # attention MXU operands

    # (2) head-batched q/k/v: (H*Bt, N, Dh).
    #     Stack heads on a new leading (batch) axis, then split the row axis.
    #     (Row split is tile-aligned since N is a multiple of the sublane tile.)
    def heads(base):
        t = jnp.stack(
            [qkv[:, base + h * Dh: base + (h + 1) * Dh] for h in range(H)],
            axis=0)                                             # (H, Bt*N, Dh)
        return t.reshape(H * Bt, N, Dh)

    q = heads(0)        # softmax scale already folded into the q weight columns
    k = heads(C)
    v = heads(2 * C)

    # (3) attention, batched over (head, batch-row) on the MXU; stats in f32.
    s = lax.dot_general(q, k, (((2,), (2,)), ((0,), (0,))),
                        preferred_element_type=jnp.float32)     # (H*Bt, N, N)
    s = s - jnp.max(s, axis=-1, keepdims=True)
    p = jnp.exp(s)
    # approx=False keeps tight numerics; approx=True would route this to the
    # otherwise-idle EUP slot at ~1e-3 relative error.
    p = p * pl.reciprocal(jnp.sum(p, axis=-1, keepdims=True), approx=False)
    # attn_drop(p=0.0) -> identity.
    o = lax.dot_general(p.astype(mxu_dtype), v, (((2,), (1,)), ((0,), (0,))),
                        preferred_element_type=jnp.float32)     # (H*Bt, N, Dh)

    # (4) re-pack heads along lanes (single concatenate, no masked scratch
    #     stores), then output projection + bias (proj_drop p=0.0 -> identity).
    y = jnp.concatenate(
        [jnp.concatenate([o[h * Bt + b] for h in range(H)], axis=-1)
         for b in range(Bt)], axis=0)                           # (Bt*N, C) f32
    y = jnp.dot(y.astype(mxu_dtype), w_proj_ref[...],
                preferred_element_type=jnp.float32) + b_proj_ref[...]
    o_ref[...] = y.reshape(Bt, N, C).astype(o_ref.dtype)


# --------------------------------------------------------------------------- #
# Wrapper
# --------------------------------------------------------------------------- #
def attention_forward(x, params, num_heads, *, mxu_dtype=jnp.bfloat16,
                      b_tile=None):
    """Forward pass matching Attention.forward (qkv_bias=False, dropout p=0).

    mxu_dtype: operand dtype for the MXU matmuls (accumulation is always f32,
    softmax statistics are always f32).  Default bf16 (the MXU's native rate on
    v5e/v6e/v7x); pass jnp.float32 for reference-tight numerics.
    """
    B, N, C = x.shape
    assert C % num_heads == 0, "C must be divisible by num_heads"
    Dh = C // num_heads
    scale = Dh ** (-0.5)                      # qk_scale=None -> head_dim**-0.5

    if b_tile is None:
        # Keep >=2 grid steps when possible (both v7x TensorCores fed) while
        # amortizing the ~0.35us per-step pipeline overhead for larger B.
        cap = max(1, min(8, B // 2)) if B > 1 else 1
        b_tile = max(d for d in range(1, cap + 1) if B % d == 0)
    assert B % b_tile == 0

    # Fold the softmax scale into the q columns of the qkv weight (one-time,
    # tiny) and pre-cast weights to the MXU dtype -> no per-step casts/scaling
    # inside the kernel.  Weights are stored (in, out): y = x @ W.
    w_qkv = params["w_qkv"]                   # (C, 3C)
    w_qkv = jnp.concatenate([w_qkv[:, :C] * scale, w_qkv[:, C:]],
                            axis=1).astype(mxu_dtype)
    w_proj = params["w_proj"].astype(mxu_dtype)                # (C, C)
    b_proj = params["b_proj"].reshape(1, C).astype(jnp.float32)

    kern = functools.partial(_fused_attention_kernel,
                             num_heads=num_heads, mxu_dtype=mxu_dtype)

    return pl.pallas_call(
        kern,
        out_shape=jax.ShapeDtypeStruct((B, N, C), x.dtype),
        grid=(B // b_tile,),
        in_specs=[
            pl.BlockSpec((b_tile, N, C), lambda b: (b, 0, 0)),
            pl.BlockSpec((C, 3 * C), lambda b: (0, 0)),   # resident weight
            pl.BlockSpec((C, C), lambda b: (0, 0)),       # resident weight
            pl.BlockSpec((1, C), lambda b: (0, 0)),       # resident bias
        ],
        out_specs=pl.BlockSpec((b_tile, N, C), lambda b: (b, 0, 0)),
        compiler_params=pltpu.CompilerParams(
            dimension_semantics=("parallel",)),
    )(x, w_qkv, w_proj, b_proj)


# --------------------------------------------------------------------------- #
# Pure-JAX reference for verification
# --------------------------------------------------------------------------- #
def attention_reference(x, params, num_heads):
    B, N, C = x.shape
    Dh = C // num_heads
    scale = Dh ** (-0.5)
    qkv = x @ params["w_qkv"]                                   # qkv_bias=False
    qkv = qkv.reshape(B, N, 3, num_heads, Dh).transpose(2, 0, 3, 1, 4)
    q, k, v = qkv[0], qkv[1], qkv[2]
    attn = jnp.einsum("bhqd,bhkd->bhqk", q, k) * scale
    attn = jax.nn.softmax(attn, axis=-1)
    o = jnp.einsum("bhqk,bhkd->bhqd", attn, v)
    o = o.transpose(0, 2, 1, 3).reshape(B, N, C)
    return o @ params["w_proj"] + params["b_proj"]


# --------------------------------------------------------------------------- #
# Main
# --------------------------------------------------------------------------- #
if __name__ == "__main__":
    B, N, C = 2, 16, 64
    num_heads = 8

    key = jax.random.PRNGKey(0)
    kx, kq, kp, kb = jax.random.split(key, 4)

    x = jax.random.normal(kx, (B, N, C), dtype=jnp.float32)

    # Deterministic synthetic parameters (weights stored as (in, out) so the
    # kernel computes y = x @ W, equivalent to torch's x @ W_torch.T).
    params = {
        "w_qkv": jax.random.normal(kq, (C, 3 * C), dtype=jnp.float32) * 0.05,
        "w_proj": jax.random.normal(kp, (C, C), dtype=jnp.float32) * 0.05,
        "b_proj": jax.random.normal(kb, (C,), dtype=jnp.float32) * 0.05,
    }

    y_ref = attention_reference(x, params, num_heads)

    # Reference-precision path (f32 MXU operands): tight tolerance.
    y_f32 = attention_forward(x, params, num_heads, mxu_dtype=jnp.float32)
    y_f32 = jax.block_until_ready(y_f32)
    assert y_f32.shape == (B, N, C)
    assert jnp.allclose(y_f32, y_ref, atol=1e-4, rtol=1e-4), \
        "f32-path mismatch vs reference"

    # Fast default path (bf16 MXU operands, f32 accumulation/softmax stats):
    # looser tolerance as sanctioned by the perf review.
    y_bf16 = attention_forward(x, params, num_heads)
    y_bf16 = jax.block_until_ready(y_bf16)
    assert y_bf16.shape == (B, N, C)
    assert jnp.allclose(y_bf16, y_ref, atol=2e-2, rtol=2e-2), \
        "bf16-path mismatch vs reference"

    print("KERNEL_OK")
</pallas_src>

<mosaic_0001>
module attributes {stable_mosaic.version = 11 : i64} {
  func.func @_fused_attention_kernel(%arg0: i32, %arg1: memref<1x16x64xf32, #tpu.memory_space<vmem>>, %arg2: memref<64x192xf32, #tpu.memory_space<vmem>>, %arg3: memref<64x64xf32, #tpu.memory_space<vmem>>, %arg4: memref<1x64xf32, #tpu.memory_space<vmem>>, %arg5: memref<1x16x64xf32, #tpu.memory_space<vmem>>) attributes {dimension_semantics = [#tpu.dimension_semantics<parallel>], iteration_bounds = array<i64: 2>, scalar_prefetch = 0 : i64, scratch_operands = 0 : i64, tpu.core_type = #tpu.core_type<tc>, window_params = [{transform_indices = @transform_0, window_bounds = array<i64: 1, 16, 64>}, {pipeline_mode = #tpu.pipeline_mode<synchronous>, transform_indices = @transform_1, window_bounds = array<i64: 64, 192>}, {pipeline_mode = #tpu.pipeline_mode<synchronous>, transform_indices = @transform_2, window_bounds = array<i64: 64, 64>}, {pipeline_mode = #tpu.pipeline_mode<synchronous>, transform_indices = @transform_3, window_bounds = array<i64: 1, 64>}, {transform_indices = @transform_4, window_bounds = array<i64: 1, 16, 64>}]} {
    %c0 = arith.constant 0 : index
    %c0_0 = arith.constant 0 : index
    %c0_1 = arith.constant 0 : index
    %0 = vector.load %arg1[%c0, %c0_0, %c0_1] : memref<1x16x64xf32, #tpu.memory_space<vmem>>, vector<1x16x64xf32>
    %1 = vector.shape_cast %0 : vector<1x16x64xf32> to vector<16x64xf32>
    %c0_2 = arith.constant 0 : index
    %c0_3 = arith.constant 0 : index
    %2 = vector.load %arg2[%c0_2, %c0_3] : memref<64x192xf32, #tpu.memory_space<vmem>>, vector<64x192xf32>
    %cst = arith.constant dense<0.000000e+00> : vector<16x192xf32>
    %3 = tpu.matmul %1, %2, %cst {dimension_numbers = #tpu.dot_dimension_numbers<[1], [0], [0], [1], [0, 0, 1, 1], [], []>} : vector<16x64xf32>, vector<64x192xf32>, vector<16x192xf32> -> vector<16x192xf32>
    %4 = vector.extract_strided_slice %3 {offsets = [0, 0], sizes = [16, 8], strides = [1, 1]} : vector<16x192xf32> to vector<16x8xf32>
    %5 = vector.extract_strided_slice %3 {offsets = [0, 8], sizes = [16, 8], strides = [1, 1]} : vector<16x192xf32> to vector<16x8xf32>
    %6 = vector.extract_strided_slice %3 {offsets = [0, 16], sizes = [16, 8], strides = [1, 1]} : vector<16x192xf32> to vector<16x8xf32>
    %7 = vector.extract_strided_slice %3 {offsets = [0, 24], sizes = [16, 8], strides = [1, 1]} : vector<16x192xf32> to vector<16x8xf32>
    %8 = vector.extract_strided_slice %3 {offsets = [0, 32], sizes = [16, 8], strides = [1, 1]} : vector<16x192xf32> to vector<16x8xf32>
    %9 = vector.extract_strided_slice %3 {offsets = [0, 40], sizes = [16, 8], strides = [1, 1]} : vector<16x192xf32> to vector<16x8xf32>
    %10 = vector.extract_strided_slice %3 {offsets = [0, 48], sizes = [16, 8], strides = [1, 1]} : vector<16x192xf32> to vector<16x8xf32>
    %11 = vector.extract_strided_slice %3 {offsets = [0, 56], sizes = [16, 8], strides = [1, 1]} : vector<16x192xf32> to vector<16x8xf32>
    %12 = vector.shape_cast %4 : vector<16x8xf32> to vector<1x16x8xf32>
    %13 = vector.shape_cast %5 : vector<16x8xf32> to vector<1x16x8xf32>
    %14 = vector.shape_cast %6 : vector<16x8xf32> to vector<1x16x8xf32>
    %15 = vector.shape_cast %7 : vector<16x8xf32> to vector<1x16x8xf32>
    %16 = vector.shape_cast %8 : vector<16x8xf32> to vector<1x16x8xf32>
    %17 = vector.shape_cast %9 : vector<16x8xf32> to vector<1x16x8xf32>
    %18 = vector.shape_cast %10 : vector<16x8xf32> to vector<1x16x8xf32>
    %19 = vector.shape_cast %11 : vector<16x8xf32> to vector<1x16x8xf32>
    %20 = tpu.concatenate %12, %13, %14, %15, %16, %17, %18, %19 in 0 : vector<1x16x8xf32>, vector<1x16x8xf32>, vector<1x16x8xf32>, vector<1x16x8xf32>, vector<1x16x8xf32>, vector<1x16x8xf32>, vector<1x16x8xf32>, vector<1x16x8xf32> -> vector<8x16x8xf32>
    %21 = vector.extract_strided_slice %3 {offsets = [0, 64], sizes = [16, 8], strides = [1, 1]} : vector<16x192xf32> to vector<16x8xf32>
    %22 = vector.extract_strided_slice %3 {offsets = [0, 72], sizes = [16, 8], strides = [1, 1]} : vector<16x192xf32> to vector<16x8xf32>
    %23 = vector.extract_strided_slice %3 {offsets = [0, 80], sizes = [16, 8], strides = [1, 1]} : vector<16x192xf32> to vector<16x8xf32>
    %24 = vector.extract_strided_slice %3 {offsets = [0, 88], sizes = [16, 8], strides = [1, 1]} : vector<16x192xf32> to vector<16x8xf32>
    %25 = vector.extract_strided_slice %3 {offsets = [0, 96], sizes = [16, 8], strides = [1, 1]} : vector<16x192xf32> to vector<16x8xf32>
    %26 = vector.extract_strided_slice %3 {offsets = [0, 104], sizes = [16, 8], strides = [1, 1]} : vector<16x192xf32> to vector<16x8xf32>
    %27 = vector.extract_strided_slice %3 {offsets = [0, 112], sizes = [16, 8], strides = [1, 1]} : vector<16x192xf32> to vector<16x8xf32>
    %28 = vector.extract_strided_slice %3 {offsets = [0, 120], sizes = [16, 8], strides = [1, 1]} : vector<16x192xf32> to vector<16x8xf32>
    %29 = vector.shape_cast %21 : vector<16x8xf32> to vector<1x16x8xf32>
    %30 = vector.shape_cast %22 : vector<16x8xf32> to vector<1x16x8xf32>
    %31 = vector.shape_cast %23 : vector<16x8xf32> to vector<1x16x8xf32>
    %32 = vector.shape_cast %24 : vector<16x8xf32> to vector<1x16x8xf32>
    %33 = vector.shape_cast %25 : vector<16x8xf32> to vector<1x16x8xf32>
    %34 = vector.shape_cast %26 : vector<16x8xf32> to vector<1x16x8xf32>
    %35 = vector.shape_cast %27 : vector<16x8xf32> to vector<1x16x8xf32>
    %36 = vector.shape_cast %28 : vector<16x8xf32> to vector<1x16x8xf32>
    %37 = tpu.concatenate %29, %30, %31, %32, %33, %34, %35, %36 in 0 : vector<1x16x8xf32>, vector<1x16x8xf32>, vector<1x16x8xf32>, vector<1x16x8xf32>, vector<1x16x8xf32>, vector<1x16x8xf32>, vector<1x16x8xf32>, vector<1x16x8xf32> -> vector<8x16x8xf32>
    %38 = vector.extract_strided_slice %3 {offsets = [0, 128], sizes = [16, 8], strides = [1, 1]} : vector<16x192xf32> to vector<16x8xf32>
    %39 = vector.extract_strided_slice %3 {offsets = [0, 136], sizes = [16, 8], strides = [1, 1]} : vector<16x192xf32> to vector<16x8xf32>
    %40 = vector.extract_strided_slice %3 {offsets = [0, 144], sizes = [16, 8], strides = [1, 1]} : vector<16x192xf32> to vector<16x8xf32>
    %41 = vector.extract_strided_slice %3 {offsets = [0, 152], sizes = [16, 8], strides = [1, 1]} : vector<16x192xf32> to vector<16x8xf32>
    %42 = vector.extract_strided_slice %3 {offsets = [0, 160], sizes = [16, 8], strides = [1, 1]} : vector<16x192xf32> to vector<16x8xf32>
    %43 = vector.extract_strided_slice %3 {offsets = [0, 168], sizes = [16, 8], strides = [1, 1]} : vector<16x192xf32> to vector<16x8xf32>
    %44 = vector.extract_strided_slice %3 {offsets = [0, 176], sizes = [16, 8], strides = [1, 1]} : vector<16x192xf32> to vector<16x8xf32>
    %45 = vector.extract_strided_slice %3 {offsets = [0, 184], sizes = [16, 8], strides = [1, 1]} : vector<16x192xf32> to vector<16x8xf32>
    %46 = vector.shape_cast %38 : vector<16x8xf32> to vector<1x16x8xf32>
    %47 = vector.shape_cast %39 : vector<16x8xf32> to vector<1x16x8xf32>
    %48 = vector.shape_cast %40 : vector<16x8xf32> to vector<1x16x8xf32>
    %49 = vector.shape_cast %41 : vector<16x8xf32> to vector<1x16x8xf32>
    %50 = vector.shape_cast %42 : vector<16x8xf32> to vector<1x16x8xf32>
    %51 = vector.shape_cast %43 : vector<16x8xf32> to vector<1x16x8xf32>
    %52 = vector.shape_cast %44 : vector<16x8xf32> to vector<1x16x8xf32>
    %53 = vector.shape_cast %45 : vector<16x8xf32> to vector<1x16x8xf32>
    %54 = tpu.concatenate %46, %47, %48, %49, %50, %51, %52, %53 in 0 : vector<1x16x8xf32>, vector<1x16x8xf32>, vector<1x16x8xf32>, vector<1x16x8xf32>, vector<1x16x8xf32>, vector<1x16x8xf32>, vector<1x16x8xf32>, vector<1x16x8xf32> -> vector<8x16x8xf32>
    %cst_4 = arith.constant dense<0.000000e+00> : vector<8x16x16xf32>
    %55 = tpu.matmul %20, %37, %cst_4 {dimension_numbers = #tpu.dot_dimension_numbers<[2], [2], [1], [1], [0, 0, 0, 1, 1, 1], [0], [0]>} : vector<8x16x8xf32>, vector<8x16x8xf32>, vector<8x16x16xf32> -> vector<8x16x16xf32>
    %cst_5 = arith.constant dense<0xFF800000> : vector<8x16xf32>
    %56 = vector.multi_reduction <maximumf>, %55, %cst_5 [2] : vector<8x16x16xf32> to vector<8x16xf32>
    %57 = vector.shape_cast %56 : vector<8x16xf32> to vector<8x16x1xf32>
    %58 = vector.broadcast %57 : vector<8x16x1xf32> to vector<8x16x16xf32>
    %59 = arith.subf %55, %58 : vector<8x16x16xf32>
    %60 = math.exp %59 : vector<8x16x16xf32>
    %cst_6 = arith.constant dense<0.000000e+00> : vector<8x16xf32>
    %61 = vector.multi_reduction <add>, %60, %cst_6 [2] : vector<8x16x16xf32> to vector<8x16xf32>
    %62 = vector.shape_cast %61 : vector<8x16xf32> to vector<8x16x1xf32>
    %63 = tpu.reciprocal %62 : vector<8x16x1xf32> -> vector<8x16x1xf32>
    %64 = vector.broadcast %63 : vector<8x16x1xf32> to vector<8x16x16xf32>
    %65 = arith.mulf %60, %64 : vector<8x16x16xf32>
    %cst_7 = arith.constant dense<0.000000e+00> : vector<8x16x8xf32>
    %66 = tpu.matmul %65, %54, %cst_7 {dimension_numbers = #tpu.dot_dimension_numbers<[2], [1], [1], [2], [0, 0, 0, 1, 1, 2], [0], [0]>} : vector<8x16x16xf32>, vector<8x16x8xf32>, vector<8x16x8xf32> -> vector<8x16x8xf32>
    %67 = vector.extract_strided_slice %66 {offsets = [0, 0, 0], sizes = [1, 16, 8], strides = [1, 1, 1]} : vector<8x16x8xf32> to vector<1x16x8xf32>
    %68 = vector.shape_cast %67 : vector<1x16x8xf32> to vector<16x8xf32>
    %69 = vector.extract_strided_slice %66 {offsets = [1, 0, 0], sizes = [1, 16, 8], strides = [1, 1, 1]} : vector<8x16x8xf32> to vector<1x16x8xf32>
    %70 = vector.shape_cast %69 : vector<1x16x8xf32> to vector<16x8xf32>
    %71 = vector.extract_strided_slice %66 {offsets = [2, 0, 0], sizes = [1, 16, 8], strides = [1, 1, 1]} : vector<8x16x8xf32> to vector<1x16x8xf32>
    %72 = vector.shape_cast %71 : vector<1x16x8xf32> to vector<16x8xf32>
    %73 = vector.extract_strided_slice %66 {offsets = [3, 0, 0], sizes = [1, 16, 8], strides = [1, 1, 1]} : vector<8x16x8xf32> to vector<1x16x8xf32>
    %74 = vector.shape_cast %73 : vector<1x16x8xf32> to vector<16x8xf32>
    %75 = vector.extract_strided_slice %66 {offsets = [4, 0, 0], sizes = [1, 16, 8], strides = [1, 1, 1]} : vector<8x16x8xf32> to vector<1x16x8xf32>
    %76 = vector.shape_cast %75 : vector<1x16x8xf32> to vector<16x8xf32>
    %77 = vector.extract_strided_slice %66 {offsets = [5, 0, 0], sizes = [1, 16, 8], strides = [1, 1, 1]} : vector<8x16x8xf32> to vector<1x16x8xf32>
    %78 = vector.shape_cast %77 : vector<1x16x8xf32> to vector<16x8xf32>
    %79 = vector.extract_strided_slice %66 {offsets = [6, 0, 0], sizes = [1, 16, 8], strides = [1, 1, 1]} : vector<8x16x8xf32> to vector<1x16x8xf32>
    %80 = vector.shape_cast %79 : vector<1x16x8xf32> to vector<16x8xf32>
    %81 = vector.extract_strided_slice %66 {offsets = [7, 0, 0], sizes = [1, 16, 8], strides = [1, 1, 1]} : vector<8x16x8xf32> to vector<1x16x8xf32>
    %82 = vector.shape_cast %81 : vector<1x16x8xf32> to vector<16x8xf32>
    %83 = tpu.concatenate %68, %70, %72, %74, %76, %78, %80, %82 in 1 : vector<16x8xf32>, vector<16x8xf32>, vector<16x8xf32>, vector<16x8xf32>, vector<16x8xf32>, vector<16x8xf32>, vector<16x8xf32>, vector<16x8xf32> -> vector<16x64xf32>
    %c0_8 = arith.constant 0 : index
    %c0_9 = arith.constant 0 : index
    %84 = vector.load %arg3[%c0_8, %c0_9] : memref<64x64xf32, #tpu.memory_space<vmem>>, vector<64x64xf32>
    %cst_10 = arith.constant dense<0.000000e+00> : vector<16x64xf32>
    %85 = tpu.matmul %83, %84, %cst_10 {dimension_numbers = #tpu.dot_dimension_numbers<[1], [0], [0], [1], [0, 0, 1, 1], [], []>} : vector<16x64xf32>, vector<64x64xf32>, vector<16x64xf32> -> vector<16x64xf32>
    %c0_11 = arith.constant 0 : index
    %c0_12 = arith.constant 0 : index
    %86 = vector.load %arg4[%c0_11, %c0_12] : memref<1x64xf32, #tpu.memory_space<vmem>>, vector<1x64xf32>
    %87 = vector.broadcast %86 : vector<1x64xf32> to vector<16x64xf32>
    %88 = arith.addf %85, %87 : vector<16x64xf32>
    %89 = vector.shape_cast %88 : vector<16x64xf32> to vector<1x16x64xf32>
    %c0_13 = arith.constant 0 : index
    %c0_14 = arith.constant 0 : index
    %c0_15 = arith.constant 0 : index
    %90 = vector.load %arg5[%c0_13, %c0_14, %c0_15] : memref<1x16x64xf32, #tpu.memory_space<vmem>>, vector<1x16x64xf32>
    tpu.vector_store %arg5[%c0_13, %c0_14, %c0_15], %89 {strides = array<i32>} : memref<1x16x64xf32, #tpu.memory_space<vmem>>, vector<1x16x64xf32>,
    return
  }
  func.func @transform_0(%arg0: i32) -> (i32, i32, i32) {
    %c0_i32 = arith.constant 0 : i32
    %c0_i32_0 = arith.constant 0 : i32
    %c0_i32_1 = arith.constant 0 : i32
    return %arg0, %c0_i32, %c0_i32_0 : i32, i32, i32
  }
  func.func @transform_1(%arg0: i32) -> (i32, i32) {
    %c0_i32 = arith.constant 0 : i32
    %c0_i32_0 = arith.constant 0 : i32
    %c0_i32_1 = arith.constant 0 : i32
    return %c0_i32, %c0_i32_0 : i32, i32
  }
  func.func @transform_2(%arg0: i32) -> (i32, i32) {
    %c0_i32 = arith.constant 0 : i32
    %c0_i32_0 = arith.constant 0 : i32
    %c0_i32_1 = arith.constant 0 : i32
    return %c0_i32, %c0_i32_0 : i32, i32
  }
  func.func @transform_3(%arg0: i32) -> (i32, i32) {
    %c0_i32 = arith.constant 0 : i32
    %c0_i32_0 = arith.constant 0 : i32
    %c0_i32_1 = arith.constant 0 : i32
    return %c0_i32, %c0_i32_0 : i32, i32
  }
  func.func @transform_4(%arg0: i32) -> (i32, i32, i32) {
    %c0_i32 = arith.constant 0 : i32
    %c0_i32_0 = arith.constant 0 : i32
    %c0_i32_1 = arith.constant 0 : i32
    return %arg0, %c0_i32, %c0_i32_0 : i32, i32, i32
  }
}

</mosaic_0001>

<llo_original>
// kernel: tpu_custom_call.1
$region0: #{tpu_custom_call.1}
  #allocation0 [shape = 'u32[]', space=smem, size = 0x4, offset = 0x4, fixed_abs, tag = 'smem constant byte address 0x4 - core index']
  #allocation1 [shape = 'u32[144,128]{1,0:T(1,128)}', space=vmem, size = 0x12000, scoped, tag = 'internal scratch']
  %s0 = inlined_call_operand.hbm [shape: f32[2,16,64], index: 0, kind: input, shape index: {}]
  %s1 = inlined_call_operand.hbm [shape: f32[64,192], index: 1, kind: input, shape index: {}]
  %s2 = inlined_call_operand.hbm [shape: f32[64,64], index: 2, kind: input, shape index: {}]
  %s3 = inlined_call_operand.vmem [shape: f32[1,64], index: 3, kind: input, shape index: {}]
  %s4 = inlined_call_operand.hbm [shape: f32[2,16,64], index: 4, kind: output, shape index: {}]
  %s5 = sld [smem:[#allocation0]]
  $region61: #{tpu_custom_call.1} parent=0
    _
  %s7 = ssub.s32 1, %s5
  %s8 = scalar_select 0, %s7, %s5
  $region1: #{tpu_custom_call.1} parent=0
    #allocation2 [shape = 'u8[16384]{0}', space=vmem, size = 0x4000, scoped, tag = 'input window, operand 0']
    #allocation3 [shape = 's32[2]{0}', space=sflag, size = 0x8, scoped, tag = 'scoped memory for tpu_custom_call.1']
    #allocation4 [shape = 's32[2]{0}', space=sflag, size = 0x8, scoped, tag = 'scoped memory for tpu_custom_call.1']
    #allocation5 [shape = 'u8[65536]{0}', space=vmem, size = 0x10000, scoped, tag = 'input window, operand 1, single buffered']
    #allocation6 [shape = 's32[1]{0}', space=sflag, size = 0x4, scoped, tag = 'scoped memory for tpu_custom_call.1']
    #allocation7 [shape = 'u8[32768]{0}', space=vmem, size = 0x8000, scoped, tag = 'input window, operand 2, single buffered']
    #allocation8 [shape = 'u8[16384]{0}', space=vmem, size = 0x4000, scoped, tag = 'output window, operand 0']
    %9 = vsyncpa [#allocation3], 0
    %s10 = scalar_lea.sflag [#allocation3], 1
    %11 = vsyncpa %s10, 0
    %12 = vsyncpa [#allocation6], 0
    %13 = vsyncpa [#allocation4], 0
    %s14 = scalar_lea.sflag [#allocation4], 1
    %15 = vsyncpa %s14, 0
    loop: start=0, step=1, limit=4
    $region2: #{tpu_custom_call.1} parent=1 // loop_pre_header
      _
    $region3: #{tpu_custom_call.1} parent=1 // loop_header
      %s17 = sphi 0, %s21
      %p18 = scmp.ge.s32.totalorder %s17, 4
      %s27 = sphi 0, %s29
      %s30 = sphi 0, %s27
      %s31 = sphi 0, %s30
      %s47 = sphi 0, %s31
      %s51 = sphi 0, %s51
      %s53 = sphi 0, %s51
      %s54 = sphi 0, %s53
      %s68 = sphi 0, %s54
      %s72 = sphi 0, %s72
      %s74 = sphi 0, %s72
      %s75 = sphi 0, %s74
      %s89 = sphi 0, %s75
      %s93 = sphi 0, %s93
      %s95 = sphi 0, %s93
      %s96 = sphi 0, %s95
      %s110 = sphi 0, %s96
      %s116 = sphi 0, %s118
      %s119 = sphi 0, %s116
      %s120 = sphi 0, %s119
      %s136 = sphi 0, %s120
    $region4: #{tpu_custom_call.1} parent=1 // loop_header_branch
      %20 = sbr.rel (%p18) target = $region8
    $region5: #{tpu_custom_call.1} parent=1 // loop_body
      %s22 = ssub.s32 %s17, 1
      %s23 = ssub.s32 %s17, 2
      %s24 = sadd.s32 %s17, 1
      %s25 = ssub.s32 %s17, %s24
      %p26 = scmp.eq.s32.totalorder %s25, 0
      %s28 = sadd.s32 %s27, 1
      %s29 = scalar_select %p26, %s27, %s28
      %p32 = pneg %p26
      %p33 = scmp.eq.s32.totalorder %s17, 1
      %p34 = por %p32, %p33
      %p35 = scmp.ne.s32.totalorder %s27, %s30
      %p36 = scmp.eq.s32.totalorder %s17, 0
      %p37 = por %p35, %p36
      %p38 = scmp.ne.s32.totalorder %s27, %s30
      %p39 = scmp.eq.s32.totalorder %s22, 1
      %p40 = por %p38, %p39
      %p41 = scmp.ne.s32.totalorder %s30, %s31
      %p42 = scmp.eq.s32.totalorder %s22, 0
      %p43 = por %p41, %p42
      %p44 = scmp.ne.s32.totalorder %s30, %s31
      %p45 = scmp.eq.s32.totalorder %s23, 1
      %p46 = por %p44, %p45
      %p48 = scmp.ne.s32.totalorder %s31, %s47
      %p49 = scmp.eq.s32.totalorder %s23, 0
      %p50 = por %p48, %p49
      %s52 = sadd.s32 %s51, 1
      %p55 = scmp.eq.s32.totalorder %s17, 1
      %p56 = scmp.ne.s32.totalorder %s51, %s53
      %p57 = scmp.eq.s32.totalorder %s17, 0
      %p58 = por %p56, %p57
      %p59 = scmp.ne.s32.totalorder %s51, %s53
      %p60 = scmp.eq.s32.totalorder %s22, 1
      %p61 = por %p59, %p60
      %p62 = scmp.ne.s32.totalorder %s53, %s54
      %p63 = scmp.eq.s32.totalorder %s22, 0
      %p64 = por %p62, %p63
      %p65 = scmp.ne.s32.totalorder %s53, %s54
      %p66 = scmp.eq.s32.totalorder %s23, 1
      %p67 = por %p65, %p66
      %p69 = scmp.ne.s32.totalorder %s54, %s68
      %p70 = scmp.eq.s32.totalorder %s23, 0
      %p71 = por %p69, %p70
      %s73 = sadd.s32 %s72, 1
      %p76 = scmp.eq.s32.totalorder %s17, 1
      %p77 = scmp.ne.s32.totalorder %s72, %s74
      %p78 = scmp.eq.s32.totalorder %s17, 0
      %p79 = por %p77, %p78
      %p80 = scmp.ne.s32.totalorder %s72, %s74
      %p81 = scmp.eq.s32.totalorder %s22, 1
      %p82 = por %p80, %p81
      %p83 = scmp.ne.s32.totalorder %s74, %s75
      %p84 = scmp.eq.s32.totalorder %s22, 0
      %p85 = por %p83, %p84
      %p86 = scmp.ne.s32.totalorder %s74, %s75
      %p87 = scmp.eq.s32.totalorder %s23, 1
      %p88 = por %p86, %p87
      %p90 = scmp.ne.s32.totalorder %s75, %s89
      %p91 = scmp.eq.s32.totalorder %s23, 0
      %p92 = por %p90, %p91
      %s94 = sadd.s32 %s93, 1
      %p97 = scmp.eq.s32.totalorder %s17, 1
      %p98 = scmp.ne.s32.totalorder %s93, %s95
      %p99 = scmp.eq.s32.totalorder %s17, 0
      %p100 = por %p98, %p99
      %p101 = scmp.ne.s32.totalorder %s93, %s95
      %p102 = scmp.eq.s32.totalorder %s22, 1
      %p103 = por %p101, %p102
      %p104 = scmp.ne.s32.totalorder %s95, %s96
      %p105 = scmp.eq.s32.totalorder %s22, 0
      %p106 = por %p104, %p105
      %p107 = scmp.ne.s32.totalorder %s95, %s96
      %p108 = scmp.eq.s32.totalorder %s23, 1
      %p109 = por %p107, %p108
      %p111 = scmp.ne.s32.totalorder %s96, %s110
      %p112 = scmp.eq.s32.totalorder %s23, 0
      %p113 = por %p111, %p112
      %s114 = ssub.s32 %s17, %s24
      %p115 = scmp.eq.s32.totalorder %s114, 0
      %s117 = sadd.s32 %s116, 1
      %s118 = scalar_select %p115, %s116, %s117
      %p121 = pneg %p115
      %p122 = scmp.eq.s32.totalorder %s17, 1
      %p123 = por %p121, %p122
      %p124 = scmp.ne.s32.totalorder %s116, %s119
      %p125 = scmp.eq.s32.totalorder %s17, 0
      %p126 = por %p124, %p125
      %p127 = scmp.ne.s32.totalorder %s116, %s119
      %p128 = scmp.eq.s32.totalorder %s22, 1
      %p129 = por %p127, %p128
      %p130 = scmp.ne.s32.totalorder %s119, %s120
      %p131 = scmp.eq.s32.totalorder %s22, 0
      %p132 = por %p130, %p131
      %p133 = scmp.ne.s32.totalorder %s119, %s120
      %p134 = scmp.eq.s32.totalorder %s23, 1
      %p135 = por %p133, %p134
      %p137 = scmp.ne.s32.totalorder %s120, %s136
      %p138 = scmp.eq.s32.totalorder %s23, 0
      %p139 = por %p137, %p138
      %p140 = scmp.le.s32.totalorder 1, %s17
      %p141 = scmp.lt.s32.totalorder %s17, 3
      %p142 = pnand %p140, %p141
      %p143 = pneg %p142
      // Predicated region
      $region9: #{tpu_custom_call.1} parent=5 // pred_check
        _
      $region10: #{tpu_custom_call.1} parent=5 // pred_check_branch
        %145 = sbr.rel (%p142) target = $region12
      $region11: #{tpu_custom_call.1} parent=5 // pred_region
        %s146 = ssub.s32 %s17, 1
        // Predicated region
        $region13: #{tpu_custom_call.1} parent=11 // pred_check
          %p147 = pneg %p64
        $region14: #{tpu_custom_call.1} parent=11 // pred_check_branch
          %149 = sbr.rel (%p147) target = $region16
        $region15: #{tpu_custom_call.1} parent=11 // pred_region
          %s151 = ssub.s32 2048, 2048
          %152 = vsyncadd [#allocation6], %s151
          %s153 = sshll.u32 [#allocation5], 4
          %s154 = int_to_ptr.vmem [resolvable:$true] %s153
          %159 = dma.hbm_to_vmem [thread:$0]  %s1, 2048, %s154, [#allocation6], 256, 256, 16
        $region16: #{tpu_custom_call.1} parent=11 // pred_fallthru
          _
        // Predicated region
        $region17: #{tpu_custom_call.1} parent=11 // pred_check
          %p160 = pneg %p85
        $region18: #{tpu_custom_call.1} parent=11 // pred_check_branch
          %162 = sbr.rel (%p160) target = $region20
        $region19: #{tpu_custom_call.1} parent=11 // pred_region
          %s164 = ssub.s32 1024, 1024
          %165 = vsyncadd [#allocation6], %s164
          %s166 = sshll.u32 [#allocation7], 4
          %s167 = int_to_ptr.vmem [resolvable:$true] %s166
          %172 = dma.hbm_to_vmem [thread:$0]  %s2, 1024, %s167, [#allocation6], 128, 128, 8
        $region20: #{tpu_custom_call.1} parent=11 // pred_fallthru
          _
        // Predicated region
        $region21: #{tpu_custom_call.1} parent=11 // pred_check
          %p173 = pneg %p106
        $region22: #{tpu_custom_call.1} parent=11 // pred_check_branch
          %175 = sbr.rel (%p173) target = $region24
        $region23: #{tpu_custom_call.1} parent=11 // pred_region
          _
        $region24: #{tpu_custom_call.1} parent=11 // pred_fallthru
          _
      $region12: #{tpu_custom_call.1} parent=5 // pred_fallthru
        _
      %p176 = scmp.lt.s32.totalorder %s17, 2
      // Predicated region
      $region25: #{tpu_custom_call.1} parent=5 // pred_check
        %p177 = pneg %p176
      $region26: #{tpu_custom_call.1} parent=5 // pred_check_branch
        %179 = sbr.rel (%p177) target = $region28
      $region27: #{tpu_custom_call.1} parent=5 // pred_region
        // Predicated region
        $region29: #{tpu_custom_call.1} parent=27 // pred_check
          %p180 = pneg %p37
        $region30: #{tpu_custom_call.1} parent=27 // pred_check_branch
          %182 = sbr.rel (%p180) target = $region32
        $region31: #{tpu_custom_call.1} parent=27 // pred_region
          %s183 = sand.u32 %s27, 1
          %s184 = scalar_lea.sflag [#allocation3], %s183
          %s185 = sand.u32 %s27, 1
          %s186 = smul.addr %s185, 16
          %s187 = scalar_lea.vmem [#allocation2], %s186
          %s189 = ssub.s32 256, 256
          %190 = vsyncadd %s184, %s189
          %s191 = smul.addr %s17, 2
          %s192 = smul.addr %s191, 128
          %s193 = scalar_lea.hbm %s0, %s192
          %s194 = sshll.u32 %s187, 4
          %s195 = int_to_ptr.vmem [resolvable:$true] %s194
          %200 = dma.hbm_to_vmem [thread:$0]  %s193, 256, %s195, %s184, 128, 128, 8
        $region32: #{tpu_custom_call.1} parent=27 // pred_fallthru
          _
      $region28: #{tpu_custom_call.1} parent=5 // pred_fallthru
        _
      %p201 = scmp.le.s32.totalorder 1, %s17
      %p202 = scmp.lt.s32.totalorder %s17, 3
      %p203 = pnand %p201, %p202
      %p204 = pneg %p203
      // Predicated region
      $region33: #{tpu_custom_call.1} parent=5 // pred_check
        _
      $region34: #{tpu_custom_call.1} parent=5 // pred_check_branch
        %206 = sbr.rel (%p203) target = $region36
      $region35: #{tpu_custom_call.1} parent=5 // pred_region
        %s207 = ssub.s32 %s17, 1
        %s208 = sand.u32 %s30, 1
        %s209 = scalar_lea.sflag [#allocation3], %s208
        %s210 = sand.u32 %s30, 1
        %s211 = smul.addr %s210, 16
        %s212 = scalar_lea.vmem [#allocation2], %s211
        // Predicated region
        $region37: #{tpu_custom_call.1} parent=35 // pred_check
          %p213 = pneg %p43
        $region38: #{tpu_custom_call.1} parent=35 // pred_check_branch
          %215 = sbr.rel (%p213) target = $region40
        $region39: #{tpu_custom_call.1} parent=35 // pred_region
          %216 = dma.done %s209, 256
        $region40: #{tpu_custom_call.1} parent=35 // pred_fallthru
          _
        // Predicated region
        $region41: #{tpu_custom_call.1} parent=35 // pred_check
          %p217 = pneg %p64
        $region42: #{tpu_custom_call.1} parent=35 // pred_check_branch
          %219 = sbr.rel (%p217) target = $region44
        $region43: #{tpu_custom_call.1} parent=35 // pred_region
          %220 = dma.done [#allocation6], 2048
        $region44: #{tpu_custom_call.1} parent=35 // pred_fallthru
          _
        // Predicated region
        $region45: #{tpu_custom_call.1} parent=35 // pred_check
          %p221 = pneg %p85
        $region46: #{tpu_custom_call.1} parent=35 // pred_check_branch
          %223 = sbr.rel (%p221) target = $region48
        $region47: #{tpu_custom_call.1} parent=35 // pred_region
          %224 = dma.done [#allocation6], 1024
        $region48: #{tpu_custom_call.1} parent=35 // pred_fallthru
          _
        %s225 = sand.u32 %s30, 1
        %s226 = scalar_lea.sflag [#allocation3], %s225
        %s227 = sand.u32 %s30, 1
        %s228 = smul.addr %s227, 16
        %s229 = scalar_lea.vmem [#allocation2], %s228
        %p230 = pneg %p43
        %p231 = pneg %p40
        %p232 = pneg %p64
        %p233 = pneg %p61
        %p234 = pneg %p85
        %p235 = pneg %p82
        %p236 = pneg %p106
        %p237 = pneg %p103
        %p238 = pneg %p132
        %p239 = pneg %p129
        %s240 = sand.u32 %s119, 1
        %s241 = scalar_lea.sflag [#allocation4], %s240
        %s242 = sand.u32 %s119, 1
        %s243 = smul.addr %s242, 16
        %s244 = scalar_lea.vmem [#allocation8], %s243
        %v245 = vld [vmem:[%s212] sm:$0xff]
        %v246 = vld [vmem:[%s212 + $0x8] sm:$0xff]
        %v247 = vld [vmem:[#allocation5] sm:$0xff]
        %v248 = vld [vmem:[#allocation5 + $0x8] sm:$0xff]
        %v249 = vld [vmem:[#allocation5 + $0x10] sm:$0xff]
        %v250 = vld [vmem:[#allocation5 + $0x18] sm:$0xff]
        %v251 = vld [vmem:[#allocation5 + $0x20] sm:$0xff]
        %v252 = vld [vmem:[#allocation5 + $0x28] sm:$0xff]
        %v253 = vld [vmem:[#allocation5 + $0x30] sm:$0xff]
        %v254 = vld [vmem:[#allocation5 + $0x38] sm:$0xff]
        %v255 = vld [vmem:[#allocation5 + $0x40] sm:$0xff]
        %v256 = vld [vmem:[#allocation5 + $0x48] sm:$0xff]
        %v257 = vld [vmem:[#allocation5 + $0x50] sm:$0xff]
        %v258 = vld [vmem:[#allocation5 + $0x58] sm:$0xff]
        %v259 = vld [vmem:[#allocation5 + $0x60] sm:$0xff]
        %v260 = vld [vmem:[#allocation5 + $0x68] sm:$0xff]
        %v261 = vld [vmem:[#allocation5 + $0x70] sm:$0xff]
        %v262 = vld [vmem:[#allocation5 + $0x78] sm:$0xff]
        %vm263 = vcmask 523264
        %v265 = vsel %vm263, %v245, 0
        %v268 = vsel %vm263, %v246, 0
        %270 = vmatprep.subr.mxu0 %v248
        %271 = vmatpush1.msra.mxu0 %v247
        %272 = vmatprep.subr.mxu0 %v250
        %273 = vmatpush1.msra.mxu0 %v249
        %274 = vmatprep.subr.mxu0 %v252
        %275 = vmatpush1.msra.mxu0 %v251
        %276 = vmatprep.subr.mxu0 %v254
        %277 = vmatpush1.msra.mxu0 %v253
        %278 = vmatprep.subr.mxu0 %v256
        %279 = vmatpush1.msra.mxu0 %v255
        %280 = vmatprep.subr.mxu0 %v258
        %281 = vmatpush1.msra.mxu0 %v257
        %282 = vmatprep.subr.mxu0 %v260
        %283 = vmatpush1.msra.mxu0 %v259
        %284 = vmatprep.subr.mxu0 %v262
        %285 = vmatpush1.msra.mxu0 %v261
        %286 = vmatprep.subr.mxu0 0.0
        %287 = vmatpush1.msra.mxu0 0.0
        %288 = vmatprep.subr.mxu0 0.0
        %289 = vmatpush1.msra.mxu0 0.0
        %290 = vmatprep.subr.mxu0 0.0
        %291 = vmatpush1.msra.mxu0 0.0
        %292 = vmatprep.subr.mxu0 0.0
        %293 = vmatpush1.msra.mxu0 0.0
        %294 = vmatprep.subr.mxu0 0.0
        %295 = vmatpush1.msra.mxu0 0.0
        %296 = vmatprep.subr.mxu0 0.0
        %297 = vmatpush1.msra.mxu0 0.0
        %298 = vmatprep.subr.mxu0 0.0
        %299 = vmatpush1.msra.mxu0 0.0
        %300 = vmatprep.subr.mxu0 0.0
        %301 = vmatpush1.msra.mxu0 0.0
        %302 = vmatprep.subr.mxu0 0.0
        %303 = vmatpush1.msra.mxu0 0.0
        %304 = vmatprep.subr.mxu0 0.0
        %305 = vmatpush1.msra.mxu0 0.0
        %306 = vmatprep.subr.mxu0 0.0
        %307 = vmatpush1.msra.mxu0 0.0
        %308 = vmatprep.subr.mxu0 0.0
        %309 = vmatpush1.msra.mxu0 0.0
        %310 = vmatprep.subr.mxu0 0.0
        %311 = vmatpush1.msra.mxu0 0.0
        %312 = vmatprep.subr.mxu0 0.0
        %313 = vmatpush1.msra.mxu0 0.0
        %314 = vmatprep.subr.mxu0 0.0
        %315 = vmatpush1.msra.mxu0 0.0
        %316 = vmatprep.subr.mxu0 0.0
        %317 = vmatpush1.msra.mxu0 0.0
        %318 = vmatprep.subr.mxu0 0.0
        %319 = vmatpush1.msra.mxu0 0.0
        %320 = vmatprep.subr.mxu0 0.0
        %321 = vmatpush1.msra.mxu0 0.0
        %322 = vmatprep.subr.mxu0 0.0
        %323 = vmatpush1.msra.mxu0 0.0
        %324 = vmatprep.subr.mxu0 0.0
        %325 = vmatpush1.msra.mxu0 0.0
        %326 = vmatprep.subr.mxu0 0.0
        %327 = vmatpush1.msra.mxu0 0.0
        %328 = vmatprep.subr.mxu0 0.0
        %329 = vmatpush1.msra.mxu0 0.0
        %330 = vmatprep.subr.mxu0 0.0
        %331 = vmatpush1.msra.mxu0 0.0
        %332 = vmatprep.subr.mxu0 0.0
        %333 = vmatpush1.msra.mxu0 0.0
        %334 = vmatprep.mubr.f32.mxu0 0.0
        %335 = vmatmul.mubr.f32.gmra.mrb[0].mxu0 %v265
        %v336 = vpop.f32.mrb[0].mxu0
        %v337 = vadd.f32 0.0, %v336
        %v338 = vpop.f32.mrb[0].mxu0
        %v339 = vadd.f32 0.0, %v338
        %340 = vmatprep.mubr.f32.mxu0 0.0
        %341 = vmatmul.mubr.f32.gmra.mrb[0].mxu0 %v268
        %v342 = vpop.f32.mrb[0].mxu0
        %v343 = vadd.f32 0.0, %v342
        %v344 = vpop.f32.mrb[0].mxu0
        %v345 = vadd.f32 0.0, %v344
        %346 = vdwg.mxu0
        %349 = vrot.lane.b32.xlu0 %v337, 120
        %v350 = vpop.permute.xlu0 %349
        %351 = vrot.lane.b32.xlu0 %v343, 120
        %v352 = vpop.permute.xlu0 %351
        %353 = vrot.lane.b32.xlu0 %v337, 112
        %v354 = vpop.permute.xlu0 %353
        %355 = vrot.lane.b32.xlu0 %v343, 112
        %v356 = vpop.permute.xlu0 %355
        %357 = vrot.lane.b32.xlu0 %v337, 104
        %v358 = vpop.permute.xlu0 %357
        %359 = vrot.lane.b32.xlu0 %v343, 104
        %v360 = vpop.permute.xlu0 %359
        %361 = vrot.lane.b32.xlu0 %v337, 96
        %v362 = vpop.permute.xlu0 %361
        %363 = vrot.lane.b32.xlu0 %v343, 96
        %v364 = vpop.permute.xlu0 %363
        %365 = vrot.lane.b32.xlu0 %v337, 88
        %v366 = vpop.permute.xlu0 %365
        %367 = vrot.lane.b32.xlu0 %v343, 88
        %v368 = vpop.permute.xlu0 %367
        %369 = vrot.lane.b32.xlu0 %v337, 80
        %v370 = vpop.permute.xlu0 %369
        %371 = vrot.lane.b32.xlu0 %v343, 80
        %v372 = vpop.permute.xlu0 %371
        %373 = vrot.lane.b32.xlu0 %v337, 72
        %v374 = vpop.permute.xlu0 %373
        %375 = vrot.lane.b32.xlu0 %v343, 72
        %v376 = vpop.permute.xlu0 %375
        %379 = vrot.lane.b32.xlu0 %v339, 120
        %v380 = vpop.permute.xlu0 %379
        %381 = vrot.lane.b32.xlu0 %v345, 120
        %v382 = vpop.permute.xlu0 %381
        %385 = vrot.lane.b32.xlu0 %v339, 112
        %v386 = vpop.permute.xlu0 %385
        %387 = vrot.lane.b32.xlu0 %v345, 112
        %v388 = vpop.permute.xlu0 %387
        %391 = vrot.lane.b32.xlu0 %v339, 104
        %v392 = vpop.permute.xlu0 %391
        %393 = vrot.lane.b32.xlu0 %v345, 104
        %v394 = vpop.permute.xlu0 %393
        %397 = vrot.lane.b32.xlu0 %v339, 96
        %v398 = vpop.permute.xlu0 %397
        %399 = vrot.lane.b32.xlu0 %v345, 96
        %v400 = vpop.permute.xlu0 %399
        %403 = vrot.lane.b32.xlu0 %v339, 88
        %v404 = vpop.permute.xlu0 %403
        %405 = vrot.lane.b32.xlu0 %v345, 88
        %v406 = vpop.permute.xlu0 %405
        %409 = vrot.lane.b32.xlu0 %v339, 80
        %v410 = vpop.permute.xlu0 %409
        %411 = vrot.lane.b32.xlu0 %v345, 80
        %v412 = vpop.permute.xlu0 %411
        %415 = vrot.lane.b32.xlu0 %v339, 72
        %v416 = vpop.permute.xlu0 %415
        %417 = vrot.lane.b32.xlu0 %v345, 72
        %v418 = vpop.permute.xlu0 %417
        %421 = vrot.lane.b32.xlu0 %v337, 64
        %v422 = vpop.permute.xlu0 %421
        %423 = vrot.lane.b32.xlu0 %v343, 64
        %v424 = vpop.permute.xlu0 %423
        %vm425 = vcmask 64512
        %v426 = vsel %vm425, %v337, 0
        %v428 = vsel %vm425, %v343, 0
        %v430 = vsel %vm425, %v422, 0
        %v432 = vsel %vm425, %v424, 0
        %434 = vmatprep.subr.mxu0 0.0
        %435 = vmatpush1.xpose.msra.mxu0 %v430
        %436 = vmatprep.subr.mxu0 0.0
        %437 = vmatpush1.xpose.msra.mxu0 %v432
        %438 = vmatprep.subr.mxu0 0.0
        %439 = vmatpush1.xpose.msra.mxu0 0.0
        %440 = vmatprep.subr.mxu0 0.0
        %441 = vmatpush1.xpose.msra.mxu0 0.0
        %442 = vmatprep.subr.mxu0 0.0
        %443 = vmatpush1.xpose.msra.mxu0 0.0
        %444 = vmatprep.subr.mxu0 0.0
        %445 = vmatpush1.xpose.msra.mxu0 0.0
        %446 = vmatprep.subr.mxu0 0.0
        %447 = vmatpush1.xpose.msra.mxu0 0.0
        %448 = vmatprep.subr.mxu0 0.0
        %449 = vmatpush1.xpose.msra.mxu0 0.0
        %450 = vmatprep.subr.mxu0 0.0
        %451 = vmatpush1.xpose.msra.mxu0 0.0
        %452 = vmatprep.subr.mxu0 0.0
        %453 = vmatpush1.xpose.msra.mxu0 0.0
        %454 = vmatprep.subr.mxu0 0.0
        %455 = vmatpush1.xpose.msra.mxu0 0.0
        %456 = vmatprep.subr.mxu0 0.0
        %457 = vmatpush1.xpose.msra.mxu0 0.0
        %458 = vmatprep.subr.mxu0 0.0
        %459 = vmatpush1.xpose.msra.mxu0 0.0
        %460 = vmatprep.subr.mxu0 0.0
        %461 = vmatpush1.xpose.msra.mxu0 0.0
        %462 = vmatprep.subr.mxu0 0.0
        %463 = vmatpush1.xpose.msra.mxu0 0.0
        %464 = vmatprep.subr.mxu0 0.0
        %465 = vmatpush1.xpose.msra.mxu0 0.0
        %466 = vmatprep.subr.mxu0 0.0
        %467 = vmatpush1.xpose.msra.mxu0 0.0
        %468 = vmatprep.subr.mxu0 0.0
        %469 = vmatpush1.xpose.msra.mxu0 0.0
        %470 = vmatprep.subr.mxu0 0.0
        %471 = vmatpush1.xpose.msra.mxu0 0.0
        %472 = vmatprep.subr.mxu0 0.0
        %473 = vmatpush1.xpose.msra.mxu0 0.0
        %474 = vmatprep.subr.mxu0 0.0
        %475 = vmatpush1.xpose.msra.mxu0 0.0
        %476 = vmatprep.subr.mxu0 0.0
        %477 = vmatpush1.xpose.msra.mxu0 0.0
        %478 = vmatprep.subr.mxu0 0.0
        %479 = vmatpush1.xpose.msra.mxu0 0.0
        %480 = vmatprep.subr.mxu0 0.0
        %481 = vmatpush1.xpose.msra.mxu0 0.0
        %482 = vmatprep.subr.mxu0 0.0
        %483 = vmatpush1.xpose.msra.mxu0 0.0
        %484 = vmatprep.subr.mxu0 0.0
        %485 = vmatpush1.xpose.msra.mxu0 0.0
        %486 = vmatprep.subr.mxu0 0.0
        %487 = vmatpush1.xpose.msra.mxu0 0.0
        %488 = vmatprep.subr.mxu0 0.0
        %489 = vmatpush1.xpose.msra.mxu0 0.0
        %490 = vmatprep.subr.mxu0 0.0
        %491 = vmatpush1.xpose.msra.mxu0 0.0
        %492 = vmatprep.subr.mxu0 0.0
        %493 = vmatpush1.xpose.msra.mxu0 0.0
        %494 = vmatprep.subr.mxu0 0.0
        %495 = vmatpush1.xpose.msra.mxu0 0.0
        %496 = vmatprep.subr.mxu0 0.0
        %497 = vmatpush1.xpose.msra.mxu0 0.0
        %498 = vmatprep.mubr.f32.mxu0 0.0
        %499 = vmatmul.mubr.f32.gmra.mrb[0].mxu0 %v426
        %v500 = vpop.f32.mrb[0].mxu0
        %v501 = vadd.f32 0.0, %v500
        %v502 = vpop.f32.mrb[0].mxu0
        %503 = vmatprep.mubr.f32.mxu0 0.0
        %504 = vmatmul.mubr.f32.gmra.mrb[0].mxu0 %v428
        %v505 = vpop.f32.mrb[0].mxu0
        %v506 = vadd.f32 0.0, %v505
        %v507 = vpop.f32.mrb[0].mxu0
        %508 = vdwg.mxu0
        %509 = vrot.lane.b32.xlu0 %v350, 64
        %v510 = vpop.permute.xlu0 %509
        %511 = vrot.lane.b32.xlu0 %v352, 64
        %v512 = vpop.permute.xlu0 %511
        %v513 = vsel %vm425, %v350, 0
        %v515 = vsel %vm425, %v352, 0
        %v517 = vsel %vm425, %v510, 0
        %v519 = vsel %vm425, %v512, 0
        %521 = vmatprep.subr.mxu0 0.0
        %522 = vmatpush1.xpose.msra.mxu0 %v517
        %523 = vmatprep.subr.mxu0 0.0
        %524 = vmatpush1.xpose.msra.mxu0 %v519
        %525 = vmatprep.subr.mxu0 0.0
        %526 = vmatpush1.xpose.msra.mxu0 0.0
        %527 = vmatprep.subr.mxu0 0.0
        %528 = vmatpush1.xpose.msra.mxu0 0.0
        %529 = vmatprep.subr.mxu0 0.0
        %530 = vmatpush1.xpose.msra.mxu0 0.0
        %531 = vmatprep.subr.mxu0 0.0
        %532 = vmatpush1.xpose.msra.mxu0 0.0
        %533 = vmatprep.subr.mxu0 0.0
        %534 = vmatpush1.xpose.msra.mxu0 0.0
        %535 = vmatprep.subr.mxu0 0.0
        %536 = vmatpush1.xpose.msra.mxu0 0.0
        %537 = vmatprep.subr.mxu0 0.0
        %538 = vmatpush1.xpose.msra.mxu0 0.0
        %539 = vmatprep.subr.mxu0 0.0
        %540 = vmatpush1.xpose.msra.mxu0 0.0
        %541 = vmatprep.subr.mxu0 0.0
        %542 = vmatpush1.xpose.msra.mxu0 0.0
        %543 = vmatprep.subr.mxu0 0.0
        %544 = vmatpush1.xpose.msra.mxu0 0.0
        %545 = vmatprep.subr.mxu0 0.0
        %546 = vmatpush1.xpose.msra.mxu0 0.0
        %547 = vmatprep.subr.mxu0 0.0
        %548 = vmatpush1.xpose.msra.mxu0 0.0
        %549 = vmatprep.subr.mxu0 0.0
        %550 = vmatpush1.xpose.msra.mxu0 0.0
        %551 = vmatprep.subr.mxu0 0.0
        %552 = vmatpush1.xpose.msra.mxu0 0.0
        %553 = vmatprep.subr.mxu0 0.0
        %554 = vmatpush1.xpose.msra.mxu0 0.0
        %555 = vmatprep.subr.mxu0 0.0
        %556 = vmatpush1.xpose.msra.mxu0 0.0
        %557 = vmatprep.subr.mxu0 0.0
        %558 = vmatpush1.xpose.msra.mxu0 0.0
        %559 = vmatprep.subr.mxu0 0.0
        %560 = vmatpush1.xpose.msra.mxu0 0.0
        %561 = vmatprep.subr.mxu0 0.0
        %562 = vmatpush1.xpose.msra.mxu0 0.0
        %563 = vmatprep.subr.mxu0 0.0
        %564 = vmatpush1.xpose.msra.mxu0 0.0
        %565 = vmatprep.subr.mxu0 0.0
        %566 = vmatpush1.xpose.msra.mxu0 0.0
        %567 = vmatprep.subr.mxu0 0.0
        %568 = vmatpush1.xpose.msra.mxu0 0.0
        %569 = vmatprep.subr.mxu0 0.0
        %570 = vmatpush1.xpose.msra.mxu0 0.0
        %571 = vmatprep.subr.mxu0 0.0
        %572 = vmatpush1.xpose.msra.mxu0 0.0
        %573 = vmatprep.subr.mxu0 0.0
        %574 = vmatpush1.xpose.msra.mxu0 0.0
        %575 = vmatprep.subr.mxu0 0.0
        %576 = vmatpush1.xpose.msra.mxu0 0.0
        %577 = vmatprep.subr.mxu0 0.0
        %578 = vmatpush1.xpose.msra.mxu0 0.0
        %579 = vmatprep.subr.mxu0 0.0
        %580 = vmatpush1.xpose.msra.mxu0 0.0
        %581 = vmatprep.subr.mxu0 0.0
        %582 = vmatpush1.xpose.msra.mxu0 0.0
        %583 = vmatprep.subr.mxu0 0.0
        %584 = vmatpush1.xpose.msra.mxu0 0.0
        %585 = vmatprep.mubr.f32.mxu0 0.0
        %586 = vmatmul.mubr.f32.gmra.mrb[0].mxu0 %v513
        %v587 = vpop.f32.mrb[0].mxu0
        %v588 = vadd.f32 0.0, %v587
        %v589 = vpop.f32.mrb[0].mxu0
        %590 = vmatprep.mubr.f32.mxu0 0.0
        %591 = vmatmul.mubr.f32.gmra.mrb[0].mxu0 %v515
        %v592 = vpop.f32.mrb[0].mxu0
        %v593 = vadd.f32 0.0, %v592
        %v594 = vpop.f32.mrb[0].mxu0
        %595 = vdwg.mxu0
        %596 = vrot.lane.b32.xlu0 %v354, 64
        %v597 = vpop.permute.xlu0 %596
        %598 = vrot.lane.b32.xlu0 %v356, 64
        %v599 = vpop.permute.xlu0 %598
        %v600 = vsel %vm425, %v354, 0
        %v602 = vsel %vm425, %v356, 0
        %v604 = vsel %vm425, %v597, 0
        %v606 = vsel %vm425, %v599, 0
        %608 = vmatprep.subr.mxu0 0.0
        %609 = vmatpush1.xpose.msra.mxu0 %v604
        %610 = vmatprep.subr.mxu0 0.0
        %611 = vmatpush1.xpose.msra.mxu0 %v606
        %612 = vmatprep.subr.mxu0 0.0
        %613 = vmatpush1.xpose.msra.mxu0 0.0
        %614 = vmatprep.subr.mxu0 0.0
        %615 = vmatpush1.xpose.msra.mxu0 0.0
        %616 = vmatprep.subr.mxu0 0.0
        %617 = vmatpush1.xpose.msra.mxu0 0.0
        %618 = vmatprep.subr.mxu0 0.0
        %619 = vmatpush1.xpose.msra.mxu0 0.0
        %620 = vmatprep.subr.mxu0 0.0
        %621 = vmatpush1.xpose.msra.mxu0 0.0
        %622 = vmatprep.subr.mxu0 0.0
        %623 = vmatpush1.xpose.msra.mxu0 0.0
        %624 = vmatprep.subr.mxu0 0.0
        %625 = vmatpush1.xpose.msra.mxu0 0.0
        %626 = vmatprep.subr.mxu0 0.0
        %627 = vmatpush1.xpose.msra.mxu0 0.0
        %628 = vmatprep.subr.mxu0 0.0
        %629 = vmatpush1.xpose.msra.mxu0 0.0
        %630 = vmatprep.subr.mxu0 0.0
        %631 = vmatpush1.xpose.msra.mxu0 0.0
        %632 = vmatprep.subr.mxu0 0.0
        %633 = vmatpush1.xpose.msra.mxu0 0.0
        %634 = vmatprep.subr.mxu0 0.0
        %635 = vmatpush1.xpose.msra.mxu0 0.0
        %636 = vmatprep.subr.mxu0 0.0
        %637 = vmatpush1.xpose.msra.mxu0 0.0
        %638 = vmatprep.subr.mxu0 0.0
        %639 = vmatpush1.xpose.msra.mxu0 0.0
        %640 = vmatprep.subr.mxu0 0.0
        %641 = vmatpush1.xpose.msra.mxu0 0.0
        %642 = vmatprep.subr.mxu0 0.0
        %643 = vmatpush1.xpose.msra.mxu0 0.0
        %644 = vmatprep.subr.mxu0 0.0
        %645 = vmatpush1.xpose.msra.mxu0 0.0
        %646 = vmatprep.subr.mxu0 0.0
        %647 = vmatpush1.xpose.msra.mxu0 0.0
        %648 = vmatprep.subr.mxu0 0.0
        %649 = vmatpush1.xpose.msra.mxu0 0.0
        %650 = vmatprep.subr.mxu0 0.0
        %651 = vmatpush1.xpose.msra.mxu0 0.0
        %652 = vmatprep.subr.mxu0 0.0
        %653 = vmatpush1.xpose.msra.mxu0 0.0
        %654 = vmatprep.subr.mxu0 0.0
        %655 = vmatpush1.xpose.msra.mxu0 0.0
        %656 = vmatprep.subr.mxu0 0.0
        %657 = vmatpush1.xpose.msra.mxu0 0.0
        %658 = vmatprep.subr.mxu0 0.0
        %659 = vmatpush1.xpose.msra.mxu0 0.0
        %660 = vmatprep.subr.mxu0 0.0
        %661 = vmatpush1.xpose.msra.mxu0 0.0
        %662 = vmatprep.subr.mxu0 0.0
        %663 = vmatpush1.xpose.msra.mxu0 0.0
        %664 = vmatprep.subr.mxu0 0.0
        %665 = vmatpush1.xpose.msra.mxu0 0.0
        %666 = vmatprep.subr.mxu0 0.0
        %667 = vmatpush1.xpose.msra.mxu0 0.0
        %668 = vmatprep.subr.mxu0 0.0
        %669 = vmatpush1.xpose.msra.mxu0 0.0
        %670 = vmatprep.subr.mxu0 0.0
        %671 = vmatpush1.xpose.msra.mxu0 0.0
        %672 = vmatprep.mubr.f32.mxu0 0.0
        %673 = vmatmul.mubr.f32.gmra.mrb[0].mxu0 %v600
        %v674 = vpop.f32.mrb[0].mxu0
        %v675 = vadd.f32 0.0, %v674
        %v676 = vpop.f32.mrb[0].mxu0
        %677 = vmatprep.mubr.f32.mxu0 0.0
        %678 = vmatmul.mubr.f32.gmra.mrb[0].mxu0 %v602
        %v679 = vpop.f32.mrb[0].mxu0
        %v680 = vadd.f32 0.0, %v679
        %v681 = vpop.f32.mrb[0].mxu0
        %682 = vdwg.mxu0
        %683 = vrot.lane.b32.xlu0 %v358, 64
        %v684 = vpop.permute.xlu0 %683
        %685 = vrot.lane.b32.xlu0 %v360, 64
        %v686 = vpop.permute.xlu0 %685
        %v687 = vsel %vm425, %v358, 0
        %v689 = vsel %vm425, %v360, 0
        %v691 = vsel %vm425, %v684, 0
        %v693 = vsel %vm425, %v686, 0
        %695 = vmatprep.subr.mxu0 0.0
        %696 = vmatpush1.xpose.msra.mxu0 %v691
        %697 = vmatprep.subr.mxu0 0.0
        %698 = vmatpush1.xpose.msra.mxu0 %v693
        %699 = vmatprep.subr.mxu0 0.0
        %700 = vmatpush1.xpose.msra.mxu0 0.0
        %701 = vmatprep.subr.mxu0 0.0
        %702 = vmatpush1.xpose.msra.mxu0 0.0
        %703 = vmatprep.subr.mxu0 0.0
        %704 = vmatpush1.xpose.msra.mxu0 0.0
        %705 = vmatprep.subr.mxu0 0.0
        %706 = vmatpush1.xpose.msra.mxu0 0.0
        %707 = vmatprep.subr.mxu0 0.0
        %708 = vmatpush1.xpose.msra.mxu0 0.0
        %709 = vmatprep.subr.mxu0 0.0
        %710 = vmatpush1.xpose.msra.mxu0 0.0
        %711 = vmatprep.subr.mxu0 0.0
        %712 = vmatpush1.xpose.msra.mxu0 0.0
        %713 = vmatprep.subr.mxu0 0.0
        %714 = vmatpush1.xpose.msra.mxu0 0.0
        %715 = vmatprep.subr.mxu0 0.0
        %716 = vmatpush1.xpose.msra.mxu0 0.0
        %717 = vmatprep.subr.mxu0 0.0
        %718 = vmatpush1.xpose.msra.mxu0 0.0
        %719 = vmatprep.subr.mxu0 0.0
        %720 = vmatpush1.xpose.msra.mxu0 0.0
        %721 = vmatprep.subr.mxu0 0.0
        %722 = vmatpush1.xpose.msra.mxu0 0.0
        %723 = vmatprep.subr.mxu0 0.0
        %724 = vmatpush1.xpose.msra.mxu0 0.0
        %725 = vmatprep.subr.mxu0 0.0
        %726 = vmatpush1.xpose.msra.mxu0 0.0
        %727 = vmatprep.subr.mxu0 0.0
        %728 = vmatpush1.xpose.msra.mxu0 0.0
        %729 = vmatprep.subr.mxu0 0.0
        %730 = vmatpush1.xpose.msra.mxu0 0.0
        %731 = vmatprep.subr.mxu0 0.0
        %732 = vmatpush1.xpose.msra.mxu0 0.0
        %733 = vmatprep.subr.mxu0 0.0
        %734 = vmatpush1.xpose.msra.mxu0 0.0
        %735 = vmatprep.subr.mxu0 0.0
        %736 = vmatpush1.xpose.msra.mxu0 0.0
        %737 = vmatprep.subr.mxu0 0.0
        %738 = vmatpush1.xpose.msra.mxu0 0.0
        %739 = vmatprep.subr.mxu0 0.0
        %740 = vmatpush1.xpose.msra.mxu0 0.0
        %741 = vmatprep.subr.mxu0 0.0
        %742 = vmatpush1.xpose.msra.mxu0 0.0
        %743 = vmatprep.subr.mxu0 0.0
        %744 = vmatpush1.xpose.msra.mxu0 0.0
        %745 = vmatprep.subr.mxu0 0.0
        %746 = vmatpush1.xpose.msra.mxu0 0.0
        %747 = vmatprep.subr.mxu0 0.0
        %748 = vmatpush1.xpose.msra.mxu0 0.0
        %749 = vmatprep.subr.mxu0 0.0
        %750 = vmatpush1.xpose.msra.mxu0 0.0
        %751 = vmatprep.subr.mxu0 0.0
        %752 = vmatpush1.xpose.msra.mxu0 0.0
        %753 = vmatprep.subr.mxu0 0.0
        %754 = vmatpush1.xpose.msra.mxu0 0.0
        %755 = vmatprep.subr.mxu0 0.0
        %756 = vmatpush1.xpose.msra.mxu0 0.0
        %757 = vmatprep.subr.mxu0 0.0
        %758 = vmatpush1.xpose.msra.mxu0 0.0
        %759 = vmatprep.mubr.f32.mxu0 0.0
        %760 = vmatmul.mubr.f32.gmra.mrb[0].mxu0 %v687
        %v761 = vpop.f32.mrb[0].mxu0
        %v762 = vadd.f32 0.0, %v761
        %v763 = vpop.f32.mrb[0].mxu0
        %764 = vmatprep.mubr.f32.mxu0 0.0
        %765 = vmatmul.mubr.f32.gmra.mrb[0].mxu0 %v689
        %v766 = vpop.f32.mrb[0].mxu0
        %v767 = vadd.f32 0.0, %v766
        %v768 = vpop.f32.mrb[0].mxu0
        %769 = vdwg.mxu0
        %770 = vrot.lane.b32.xlu0 %v362, 64
        %v771 = vpop.permute.xlu0 %770
        %772 = vrot.lane.b32.xlu0 %v364, 64
        %v773 = vpop.permute.xlu0 %772
        %v774 = vsel %vm425, %v362, 0
        %v776 = vsel %vm425, %v364, 0
        %v778 = vsel %vm425, %v771, 0
        %v780 = vsel %vm425, %v773, 0
        %782 = vmatprep.subr.mxu0 0.0
        %783 = vmatpush1.xpose.msra.mxu0 %v778
        %784 = vmatprep.subr.mxu0 0.0
        %785 = vmatpush1.xpose.msra.mxu0 %v780
        %786 = vmatprep.subr.mxu0 0.0
        %787 = vmatpush1.xpose.msra.mxu0 0.0
        %788 = vmatprep.subr.mxu0 0.0
        %789 = vmatpush1.xpose.msra.mxu0 0.0
        %790 = vmatprep.subr.mxu0 0.0
        %791 = vmatpush1.xpose.msra.mxu0 0.0
        %792 = vmatprep.subr.mxu0 0.0
        %793 = vmatpush1.xpose.msra.mxu0 0.0
        %794 = vmatprep.subr.mxu0 0.0
        %795 = vmatpush1.xpose.msra.mxu0 0.0
        %796 = vmatprep.subr.mxu0 0.0
        %797 = vmatpush1.xpose.msra.mxu0 0.0
        %798 = vmatprep.subr.mxu0 0.0
        %799 = vmatpush1.xpose.msra.mxu0 0.0
        %800 = vmatprep.subr.mxu0 0.0
        %801 = vmatpush1.xpose.msra.mxu0 0.0
        %802 = vmatprep.subr.mxu0 0.0
        %803 = vmatpush1.xpose.msra.mxu0 0.0
        %804 = vmatprep.subr.mxu0 0.0
        %805 = vmatpush1.xpose.msra.mxu0 0.0
        %806 = vmatprep.subr.mxu0 0.0
        %807 = vmatpush1.xpose.msra.mxu0 0.0
        %808 = vmatprep.subr.mxu0 0.0
        %809 = vmatpush1.xpose.msra.mxu0 0.0
        %810 = vmatprep.subr.mxu0 0.0
        %811 = vmatpush1.xpose.msra.mxu0 0.0
        %812 = vmatprep.subr.mxu0 0.0
        %813 = vmatpush1.xpose.msra.mxu0 0.0
        %814 = vmatprep.subr.mxu0 0.0
        %815 = vmatpush1.xpose.msra.mxu0 0.0
        %816 = vmatprep.subr.mxu0 0.0
        %817 = vmatpush1.xpose.msra.mxu0 0.0
        %818 = vmatprep.subr.mxu0 0.0
        %819 = vmatpush1.xpose.msra.mxu0 0.0
        %820 = vmatprep.subr.mxu0 0.0
        %821 = vmatpush1.xpose.msra.mxu0 0.0
        %822 = vmatprep.subr.mxu0 0.0
        %823 = vmatpush1.xpose.msra.mxu0 0.0
        %824 = vmatprep.subr.mxu0 0.0
        %825 = vmatpush1.xpose.msra.mxu0 0.0
        %826 = vmatprep.subr.mxu0 0.0
        %827 = vmatpush1.xpose.msra.mxu0 0.0
        %828 = vmatprep.subr.mxu0 0.0
        %829 = vmatpush1.xpose.msra.mxu0 0.0
        %830 = vmatprep.subr.mxu0 0.0
        %831 = vmatpush1.xpose.msra.mxu0 0.0
        %832 = vmatprep.subr.mxu0 0.0
        %833 = vmatpush1.xpose.msra.mxu0 0.0
        %834 = vmatprep.subr.mxu0 0.0
        %835 = vmatpush1.xpose.msra.mxu0 0.0
        %836 = vmatprep.subr.mxu0 0.0
        %837 = vmatpush1.xpose.msra.mxu0 0.0
        %838 = vmatprep.subr.mxu0 0.0
        %839 = vmatpush1.xpose.msra.mxu0 0.0
        %840 = vmatprep.subr.mxu0 0.0
        %841 = vmatpush1.xpose.msra.mxu0 0.0
        %842 = vmatprep.subr.mxu0 0.0
        %843 = vmatpush1.xpose.msra.mxu0 0.0
        %844 = vmatprep.subr.mxu0 0.0
        %845 = vmatpush1.xpose.msra.mxu0 0.0
        %846 = vmatprep.mubr.f32.mxu0 0.0
        %847 = vmatmul.mubr.f32.gmra.mrb[0].mxu0 %v774
        %v848 = vpop.f32.mrb[0].mxu0
        %v849 = vadd.f32 0.0, %v848
        %v850 = vpop.f32.mrb[0].mxu0
        %851 = vmatprep.mubr.f32.mxu0 0.0
        %852 = vmatmul.mubr.f32.gmra.mrb[0].mxu0 %v776
        %v853 = vpop.f32.mrb[0].mxu0
        %v854 = vadd.f32 0.0, %v853
        %v855 = vpop.f32.mrb[0].mxu0
        %856 = vdwg.mxu0
        %857 = vrot.lane.b32.xlu0 %v366, 64
        %v858 = vpop.permute.xlu0 %857
        %859 = vrot.lane.b32.xlu0 %v368, 64
        %v860 = vpop.permute.xlu0 %859
        %v861 = vsel %vm425, %v366, 0
        %v863 = vsel %vm425, %v368, 0
        %v865 = vsel %vm425, %v858, 0
        %v867 = vsel %vm425, %v860, 0
        %869 = vmatprep.subr.mxu0 0.0
        %870 = vmatpush1.xpose.msra.mxu0 %v865
        %871 = vmatprep.subr.mxu0 0.0
        %872 = vmatpush1.xpose.msra.mxu0 %v867
        %873 = vmatprep.subr.mxu0 0.0
        %874 = vmatpush1.xpose.msra.mxu0 0.0
        %875 = vmatprep.subr.mxu0 0.0
        %876 = vmatpush1.xpose.msra.mxu0 0.0
        %877 = vmatprep.subr.mxu0 0.0
        %878 = vmatpush1.xpose.msra.mxu0 0.0
        %879 = vmatprep.subr.mxu0 0.0
        %880 = vmatpush1.xpose.msra.mxu0 0.0
        %881 = vmatprep.subr.mxu0 0.0
        %882 = vmatpush1.xpose.msra.mxu0 0.0
        %883 = vmatprep.subr.mxu0 0.0
        %884 = vmatpush1.xpose.msra.mxu0 0.0
        %885 = vmatprep.subr.mxu0 0.0
        %886 = vmatpush1.xpose.msra.mxu0 0.0
        %887 = vmatprep.subr.mxu0 0.0
        %888 = vmatpush1.xpose.msra.mxu0 0.0
        %889 = vmatprep.subr.mxu0 0.0
        %890 = vmatpush1.xpose.msra.mxu0 0.0
        %891 = vmatprep.subr.mxu0 0.0
        %892 = vmatpush1.xpose.msra.mxu0 0.0
        %893 = vmatprep.subr.mxu0 0.0
        %894 = vmatpush1.xpose.msra.mxu0 0.0
        %895 = vmatprep.subr.mxu0 0.0
        %896 = vmatpush1.xpose.msra.mxu0 0.0
        %897 = vmatprep.subr.mxu0 0.0
        %898 = vmatpush1.xpose.msra.mxu0 0.0
        %899 = vmatprep.subr.mxu0 0.0
        %900 = vmatpush1.xpose.msra.mxu0 0.0
        %901 = vmatprep.subr.mxu0 0.0
        %902 = vmatpush1.xpose.msra.mxu0 0.0
        %903 = vmatprep.subr.mxu0 0.0
        %904 = vmatpush1.xpose.msra.mxu0 0.0
        %905 = vmatprep.subr.mxu0 0.0
        %906 = vmatpush1.xpose.msra.mxu0 0.0
        %907 = vmatprep.subr.mxu0 0.0
        %908 = vmatpush1.xpose.msra.mxu0 0.0
        %909 = vmatprep.subr.mxu0 0.0
        %910 = vmatpush1.xpose.msra.mxu0 0.0
        %911 = vmatprep.subr.mxu0 0.0
        %912 = vmatpush1.xpose.msra.mxu0 0.0
        %913 = vmatprep.subr.mxu0 0.0
        %914 = vmatpush1.xpose.msra.mxu0 0.0
        %915 = vmatprep.subr.mxu0 0.0
        %916 = vmatpush1.xpose.msra.mxu0 0.0
        %917 = vmatprep.subr.mxu0 0.0
        %918 = vmatpush1.xpose.msra.mxu0 0.0
        %919 = vmatprep.subr.mxu0 0.0
        %920 = vmatpush1.xpose.msra.mxu0 0.0
        %921 = vmatprep.subr.mxu0 0.0
        %922 = vmatpush1.xpose.msra.mxu0 0.0
        %923 = vmatprep.subr.mxu0 0.0
        %924 = vmatpush1.xpose.msra.mxu0 0.0
        %925 = vmatprep.subr.mxu0 0.0
        %926 = vmatpush1.xpose.msra.mxu0 0.0
        %927 = vmatprep.subr.mxu0 0.0
        %928 = vmatpush1.xpose.msra.mxu0 0.0
        %929 = vmatprep.subr.mxu0 0.0
        %930 = vmatpush1.xpose.msra.mxu0 0.0
        %931 = vmatprep.subr.mxu0 0.0
        %932 = vmatpush1.xpose.msra.mxu0 0.0
        %933 = vmatprep.mubr.f32.mxu0 0.0
        %934 = vmatmul.mubr.f32.gmra.mrb[0].mxu0 %v861
        %v935 = vpop.f32.mrb[0].mxu0
        %v936 = vadd.f32 0.0, %v935
        %v937 = vpop.f32.mrb[0].mxu0
        %938 = vmatprep.mubr.f32.mxu0 0.0
        %939 = vmatmul.mubr.f32.gmra.mrb[0].mxu0 %v863
        %v940 = vpop.f32.mrb[0].mxu0
        %v941 = vadd.f32 0.0, %v940
        %v942 = vpop.f32.mrb[0].mxu0
        %943 = vdwg.mxu0
        %944 = vrot.lane.b32.xlu0 %v370, 64
        %v945 = vpop.permute.xlu0 %944
        %946 = vrot.lane.b32.xlu0 %v372, 64
        %v947 = vpop.permute.xlu0 %946
        %v948 = vsel %vm425, %v370, 0
        %v950 = vsel %vm425, %v372, 0
        %v952 = vsel %vm425, %v945, 0
        %v954 = vsel %vm425, %v947, 0
        %956 = vmatprep.subr.mxu0 0.0
        %957 = vmatpush1.xpose.msra.mxu0 %v952
        %958 = vmatprep.subr.mxu0 0.0
        %959 = vmatpush1.xpose.msra.mxu0 %v954
        %960 = vmatprep.subr.mxu0 0.0
        %961 = vmatpush1.xpose.msra.mxu0 0.0
        %962 = vmatprep.subr.mxu0 0.0
        %963 = vmatpush1.xpose.msra.mxu0 0.0
        %964 = vmatprep.subr.mxu0 0.0
        %965 = vmatpush1.xpose.msra.mxu0 0.0
        %966 = vmatprep.subr.mxu0 0.0
        %967 = vmatpush1.xpose.msra.mxu0 0.0
        %968 = vmatprep.subr.mxu0 0.0
        %969 = vmatpush1.xpose.msra.mxu0 0.0
        %970 = vmatprep.subr.mxu0 0.0
        %971 = vmatpush1.xpose.msra.mxu0 0.0
        %972 = vmatprep.subr.mxu0 0.0
        %973 = vmatpush1.xpose.msra.mxu0 0.0
        %974 = vmatprep.subr.mxu0 0.0
        %975 = vmatpush1.xpose.msra.mxu0 0.0
        %976 = vmatprep.subr.mxu0 0.0
        %977 = vmatpush1.xpose.msra.mxu0 0.0
        %978 = vmatprep.subr.mxu0 0.0
        %979 = vmatpush1.xpose.msra.mxu0 0.0
        %980 = vmatprep.subr.mxu0 0.0
        %981 = vmatpush1.xpose.msra.mxu0 0.0
        %982 = vmatprep.subr.mxu0 0.0
        %983 = vmatpush1.xpose.msra.mxu0 0.0
        %984 = vmatprep.subr.mxu0 0.0
        %985 = vmatpush1.xpose.msra.mxu0 0.0
        %986 = vmatprep.subr.mxu0 0.0
        %987 = vmatpush1.xpose.msra.mxu0 0.0
        %988 = vmatprep.subr.mxu0 0.0
        %989 = vmatpush1.xpose.msra.mxu0 0.0
        %990 = vmatprep.subr.mxu0 0.0
        %991 = vmatpush1.xpose.msra.mxu0 0.0
        %992 = vmatprep.subr.mxu0 0.0
        %993 = vmatpush1.xpose.msra.mxu0 0.0
        %994 = vmatprep.subr.mxu0 0.0
        %995 = vmatpush1.xpose.msra.mxu0 0.0
        %996 = vmatprep.subr.mxu0 0.0
        %997 = vmatpush1.xpose.msra.mxu0 0.0
        %998 = vmatprep.subr.mxu0 0.0
        %999 = vmatpush1.xpose.msra.mxu0 0.0
        %1000 = vmatprep.subr.mxu0 0.0
        %1001 = vmatpush1.xpose.msra.mxu0 0.0
        %1002 = vmatprep.subr.mxu0 0.0
        %1003 = vmatpush1.xpose.msra.mxu0 0.0
        %1004 = vmatprep.subr.mxu0 0.0
        %1005 = vmatpush1.xpose.msra.mxu0 0.0
        %1006 = vmatprep.subr.mxu0 0.0
        %1007 = vmatpush1.xpose.msra.mxu0 0.0
        %1008 = vmatprep.subr.mxu0 0.0
        %1009 = vmatpush1.xpose.msra.mxu0 0.0
        %1010 = vmatprep.subr.mxu0 0.0
        %1011 = vmatpush1.xpose.msra.mxu0 0.0
        %1012 = vmatprep.subr.mxu0 0.0
        %1013 = vmatpush1.xpose.msra.mxu0 0.0
        %1014 = vmatprep.subr.mxu0 0.0
        %1015 = vmatpush1.xpose.msra.mxu0 0.0
        %1016 = vmatprep.subr.mxu0 0.0
        %1017 = vmatpush1.xpose.msra.mxu0 0.0
        %1018 = vmatprep.subr.mxu0 0.0
        %1019 = vmatpush1.xpose.msra.mxu0 0.0
        %1020 = vmatprep.mubr.f32.mxu0 0.0
        %1021 = vmatmul.mubr.f32.gmra.mrb[0].mxu0 %v948
        %v1022 = vpop.f32.mrb[0].mxu0
        %v1023 = vadd.f32 0.0, %v1022
        %v1024 = vpop.f32.mrb[0].mxu0
        %1025 = vmatprep.mubr.f32.mxu0 0.0
        %1026 = vmatmul.mubr.f32.gmra.mrb[0].mxu0 %v950
        %v1027 = vpop.f32.mrb[0].mxu0
        %v1028 = vadd.f32 0.0, %v1027
        %v1029 = vpop.f32.mrb[0].mxu0
        %1030 = vdwg.mxu0
        %1031 = vrot.lane.b32.xlu0 %v374, 64
        %v1032 = vpop.permute.xlu0 %1031
        %1033 = vrot.lane.b32.xlu0 %v376, 64
        %v1034 = vpop.permute.xlu0 %1033
        %v1035 = vsel %vm425, %v374, 0
        %v1037 = vsel %vm425, %v376, 0
        %v1039 = vsel %vm425, %v1032, 0
        %v1041 = vsel %vm425, %v1034, 0
        %1043 = vmatprep.subr.mxu0 0.0
        %1044 = vmatpush1.xpose.msra.mxu0 %v1039
        %1045 = vmatprep.subr.mxu0 0.0
        %1046 = vmatpush1.xpose.msra.mxu0 %v1041
        %1047 = vmatprep.subr.mxu0 0.0
        %1048 = vmatpush1.xpose.msra.mxu0 0.0
        %1049 = vmatprep.subr.mxu0 0.0
        %1050 = vmatpush1.xpose.msra.mxu0 0.0
        %1051 = vmatprep.subr.mxu0 0.0
        %1052 = vmatpush1.xpose.msra.mxu0 0.0
        %1053 = vmatprep.subr.mxu0 0.0
        %1054 = vmatpush1.xpose.msra.mxu0 0.0
        %1055 = vmatprep.subr.mxu0 0.0
        %1056 = vmatpush1.xpose.msra.mxu0 0.0
        %1057 = vmatprep.subr.mxu0 0.0
        %1058 = vmatpush1.xpose.msra.mxu0 0.0
        %1059 = vmatprep.subr.mxu0 0.0
        %1060 = vmatpush1.xpose.msra.mxu0 0.0
        %1061 = vmatprep.subr.mxu0 0.0
        %1062 = vmatpush1.xpose.msra.mxu0 0.0
        %1063 = vmatprep.subr.mxu0 0.0
        %1064 = vmatpush1.xpose.msra.mxu0 0.0
        %1065 = vmatprep.subr.mxu0 0.0
        %1066 = vmatpush1.xpose.msra.mxu0 0.0
        %1067 = vmatprep.subr.mxu0 0.0
        %1068 = vmatpush1.xpose.msra.mxu0 0.0
        %1069 = vmatprep.subr.mxu0 0.0
        %1070 = vmatpush1.xpose.msra.mxu0 0.0
        %1071 = vmatprep.subr.mxu0 0.0
        %1072 = vmatpush1.xpose.msra.mxu0 0.0
        %1073 = vmatprep.subr.mxu0 0.0
        %1074 = vmatpush1.xpose.msra.mxu0 0.0
        %1075 = vmatprep.subr.mxu0 0.0
        %1076 = vmatpush1.xpose.msra.mxu0 0.0
        %1077 = vmatprep.subr.mxu0 0.0
        %1078 = vmatpush1.xpose.msra.mxu0 0.0
        %1079 = vmatprep.subr.mxu0 0.0
        %1080 = vmatpush1.xpose.msra.mxu0 0.0
        %1081 = vmatprep.subr.mxu0 0.0
        %1082 = vmatpush1.xpose.msra.mxu0 0.0
        %1083 = vmatprep.subr.mxu0 0.0
        %1084 = vmatpush1.xpose.msra.mxu0 0.0
        %1085 = vmatprep.subr.mxu0 0.0
        %1086 = vmatpush1.xpose.msra.mxu0 0.0
        %1087 = vmatprep.subr.mxu0 0.0
        %1088 = vmatpush1.xpose.msra.mxu0 0.0
        %1089 = vmatprep.subr.mxu0 0.0
        %1090 = vmatpush1.xpose.msra.mxu0 0.0
        %1091 = vmatprep.subr.mxu0 0.0
        %1092 = vmatpush1.xpose.msra.mxu0 0.0
        %1093 = vmatprep.subr.mxu0 0.0
        %1094 = vmatpush1.xpose.msra.mxu0 0.0
        %1095 = vmatprep.subr.mxu0 0.0
        %1096 = vmatpush1.xpose.msra.mxu0 0.0
        %1097 = vmatprep.subr.mxu0 0.0
        %1098 = vmatpush1.xpose.msra.mxu0 0.0
        %1099 = vmatprep.subr.mxu0 0.0
        %1100 = vmatpush1.xpose.msra.mxu0 0.0
        %1101 = vmatprep.subr.mxu0 0.0
        %1102 = vmatpush1.xpose.msra.mxu0 0.0
        %1103 = vmatprep.subr.mxu0 0.0
        %1104 = vmatpush1.xpose.msra.mxu0 0.0
        %1105 = vmatprep.subr.mxu0 0.0
        %1106 = vmatpush1.xpose.msra.mxu0 0.0
        %1107 = vmatprep.mubr.f32.mxu0 0.0
        %1108 = vmatmul.mubr.f32.gmra.mrb[0].mxu0 %v1035
        %v1109 = vpop.f32.mrb[0].mxu0
        %v1110 = vadd.f32 0.0, %v1109
        %v1111 = vpop.f32.mrb[0].mxu0
        %1112 = vmatprep.mubr.f32.mxu0 0.0
        %1113 = vmatmul.mubr.f32.gmra.mrb[0].mxu0 %v1037
        %v1114 = vpop.f32.mrb[0].mxu0
        %v1115 = vadd.f32 0.0, %v1114
        %v1116 = vpop.f32.mrb[0].mxu0
        %1117 = vdwg.mxu0
        %vm1118 = vcmask 130048
        %v1119 = vsel %vm1118, %v501, -inf
        %1120 = vmax.xlane.f32.xlu0 %v1119
        %v1121 = vpop.xlane.xlu0 %1120
        %v1122 = vsel %vm1118, %v506, -inf
        %1123 = vmax.xlane.f32.xlu0 %v1122
        %v1124 = vpop.xlane.xlu0 %1123
        %v1125 = vsel %vm1118, %v588, -inf
        %1126 = vmax.xlane.f32.xlu0 %v1125
        %v1127 = vpop.xlane.xlu0 %1126
        %v1128 = vsel %vm1118, %v593, -inf
        %1129 = vmax.xlane.f32.xlu0 %v1128
        %v1130 = vpop.xlane.xlu0 %1129
        %v1131 = vsel %vm1118, %v675, -inf
        %1132 = vmax.xlane.f32.xlu0 %v1131
        %v1133 = vpop.xlane.xlu0 %1132
        %v1134 = vsel %vm1118, %v680, -inf
        %1135 = vmax.xlane.f32.xlu0 %v1134
        %v1136 = vpop.xlane.xlu0 %1135
        %v1137 = vsel %vm1118, %v762, -inf
        %1138 = vmax.xlane.f32.xlu0 %v1137
        %v1139 = vpop.xlane.xlu0 %1138
        %v1140 = vsel %vm1118, %v767, -inf
        %1141 = vmax.xlane.f32.xlu0 %v1140
        %v1142 = vpop.xlane.xlu0 %1141
        %v1143 = vsel %vm1118, %v849, -inf
        %1144 = vmax.xlane.f32.xlu0 %v1143
        %v1145 = vpop.xlane.xlu0 %1144
        %v1146 = vsel %vm1118, %v854, -inf
        %1147 = vmax.xlane.f32.xlu0 %v1146
        %v1148 = vpop.xlane.xlu0 %1147
        %v1149 = vsel %vm1118, %v936, -inf
        %1150 = vmax.xlane.f32.xlu0 %v1149
        %v1151 = vpop.xlane.xlu0 %1150
        %v1152 = vsel %vm1118, %v941, -inf
        %1153 = vmax.xlane.f32.xlu0 %v1152
        %v1154 = vpop.xlane.xlu0 %1153
        %v1155 = vsel %vm1118, %v1023, -inf
        %1156 = vmax.xlane.f32.xlu0 %v1155
        %v1157 = vpop.xlane.xlu0 %1156
        %v1158 = vsel %vm1118, %v1028, -inf
        %1159 = vmax.xlane.f32.xlu0 %v1158
        %v1160 = vpop.xlane.xlu0 %1159
        %v1161 = vsel %vm1118, %v1110, -inf
        %1162 = vmax.xlane.f32.xlu0 %v1161
        %v1163 = vpop.xlane.xlu0 %1162
        %v1164 = vsel %vm1118, %v1115, -inf
        %1165 = vmax.xlane.f32.xlu0 %v1164
        %v1166 = vpop.xlane.xlu0 %1165
        %v1167 = vsub.f32 %v501, %v1121
        %v1168 = vsub.f32 %v506, %v1124
        %v1169 = vsub.f32 %v588, %v1127
        %v1170 = vsub.f32 %v593, %v1130
        %v1171 = vsub.f32 %v675, %v1133
        %v1172 = vsub.f32 %v680, %v1136
        %v1173 = vsub.f32 %v762, %v1139
        %v1174 = vsub.f32 %v767, %v1142
        %v1175 = vsub.f32 %v849, %v1145
        %v1176 = vsub.f32 %v854, %v1148
        %v1177 = vsub.f32 %v936, %v1151
        %v1178 = vsub.f32 %v941, %v1154
        %v1179 = vsub.f32 %v1023, %v1157
        %v1180 = vsub.f32 %v1028, %v1160
        %v1181 = vsub.f32 %v1110, %v1163
        %v1182 = vsub.f32 %v1115, %v1166
        %v1183 = vmul.f32 %v1167, 1.442695
        %v1184 = vpow.pop %v1183
        %v1185 = vmul.f32 %v1168, 1.442695
        %v1186 = vpow.pop %v1185
        %v1187 = vmul.f32 %v1169, 1.442695
        %v1188 = vpow.pop %v1187
        %v1189 = vmul.f32 %v1170, 1.442695
        %v1190 = vpow.pop %v1189
        %v1191 = vmul.f32 %v1171, 1.442695
        %v1192 = vpow.pop %v1191
        %v1193 = vmul.f32 %v1172, 1.442695
        %v1194 = vpow.pop %v1193
        %v1195 = vmul.f32 %v1173, 1.442695
        %v1196 = vpow.pop %v1195
        %v1197 = vmul.f32 %v1174, 1.442695
        %v1198 = vpow.pop %v1197
        %v1199 = vmul.f32 %v1175, 1.442695
        %v1200 = vpow.pop %v1199
        %v1201 = vmul.f32 %v1176, 1.442695
        %v1202 = vpow.pop %v1201
        %v1203 = vmul.f32 %v1177, 1.442695
        %v1204 = vpow.pop %v1203
        %v1205 = vmul.f32 %v1178, 1.442695
        %v1206 = vpow.pop %v1205
        %v1207 = vmul.f32 %v1179, 1.442695
        %v1208 = vpow.pop %v1207
        %v1209 = vmul.f32 %v1180, 1.442695
        %v1210 = vpow.pop %v1209
        %v1211 = vmul.f32 %v1181, 1.442695
        %v1212 = vpow.pop %v1211
        %v1213 = vmul.f32 %v1182, 1.442695
        %v1214 = vpow.pop %v1213
        %v1215 = vsel %vm1118, %v1184, 0.0
        %1216 = vadd.xlane.f32.xlu0 %v1215
        %v1217 = vpop.xlane.xlu0 %1216
        %v1218 = vsel %vm1118, %v1186, 0.0
        %1219 = vadd.xlane.f32.xlu0 %v1218
        %v1220 = vpop.xlane.xlu0 %1219
        %v1221 = vsel %vm1118, %v1188, 0.0
        %1222 = vadd.xlane.f32.xlu0 %v1221
        %v1223 = vpop.xlane.xlu0 %1222
        %v1224 = vsel %vm1118, %v1190, 0.0
        %1225 = vadd.xlane.f32.xlu0 %v1224
        %v1226 = vpop.xlane.xlu0 %1225
        %v1227 = vsel %vm1118, %v1192, 0.0
        %1228 = vadd.xlane.f32.xlu0 %v1227
        %v1229 = vpop.xlane.xlu0 %1228
        %v1230 = vsel %vm1118, %v1194, 0.0
        %1231 = vadd.xlane.f32.xlu0 %v1230
        %v1232 = vpop.xlane.xlu0 %1231
        %v1233 = vsel %vm1118, %v1196, 0.0
        %1234 = vadd.xlane.f32.xlu0 %v1233
        %v1235 = vpop.xlane.xlu0 %1234
        %v1236 = vsel %vm1118, %v1198, 0.0
        %1237 = vadd.xlane.f32.xlu0 %v1236
        %v1238 = vpop.xlane.xlu0 %1237
        %v1239 = vsel %vm1118, %v1200, 0.0
        %1240 = vadd.xlane.f32.xlu0 %v1239
        %v1241 = vpop.xlane.xlu0 %1240
        %v1242 = vsel %vm1118, %v1202, 0.0
        %1243 = vadd.xlane.f32.xlu0 %v1242
        %v1244 = vpop.xlane.xlu0 %1243
        %v1245 = vsel %vm1118, %v1204, 0.0
        %1246 = vadd.xlane.f32.xlu0 %v1245
        %v1247 = vpop.xlane.xlu0 %1246
        %v1248 = vsel %vm1118, %v1206, 0.0
        %1249 = vadd.xlane.f32.xlu0 %v1248
        %v1250 = vpop.xlane.xlu0 %1249
        %v1251 = vsel %vm1118, %v1208, 0.0
        %1252 = vadd.xlane.f32.xlu0 %v1251
        %v1253 = vpop.xlane.xlu0 %1252
        %v1254 = vsel %vm1118, %v1210, 0.0
        %1255 = vadd.xlane.f32.xlu0 %v1254
        %v1256 = vpop.xlane.xlu0 %1255
        %v1257 = vsel %vm1118, %v1212, 0.0
        %1258 = vadd.xlane.f32.xlu0 %v1257
        %v1259 = vpop.xlane.xlu0 %1258
        %v1260 = vsel %vm1118, %v1214, 0.0
        %1261 = vadd.xlane.f32.xlu0 %v1260
        %v1262 = vpop.xlane.xlu0 %1261
        %v1263 = vrcp.pop %v1217
        %v1264 = vrcp.pop %v1220
        %v1265 = vrcp.pop %v1223
        %v1266 = vrcp.pop %v1226
        %v1267 = vrcp.pop %v1229
        %v1268 = vrcp.pop %v1232
        %v1269 = vrcp.pop %v1235
        %v1270 = vrcp.pop %v1238
        %v1271 = vrcp.pop %v1241
        %v1272 = vrcp.pop %v1244
        %v1273 = vrcp.pop %v1247
        %v1274 = vrcp.pop %v1250
        %v1275 = vrcp.pop %v1253
        %v1276 = vrcp.pop %v1256
        %v1277 = vrcp.pop %v1259
        %v1278 = vrcp.pop %v1262
        %v1279 = vmul.f32 %v1184, %v1263
        %v1280 = vmul.f32 %v1186, %v1264
        %v1281 = vmul.f32 %v1188, %v1265
        %v1282 = vmul.f32 %v1190, %v1266
        %v1283 = vmul.f32 %v1192, %v1267
        %v1284 = vmul.f32 %v1194, %v1268
        %v1285 = vmul.f32 %v1196, %v1269
        %v1286 = vmul.f32 %v1198, %v1270
        %v1287 = vmul.f32 %v1200, %v1271
        %v1288 = vmul.f32 %v1202, %v1272
        %v1289 = vmul.f32 %v1204, %v1273
        %v1290 = vmul.f32 %v1206, %v1274
        %v1291 = vmul.f32 %v1208, %v1275
        %v1292 = vmul.f32 %v1210, %v1276
        %v1293 = vmul.f32 %v1212, %v1277
        %v1294 = vmul.f32 %v1214, %v1278
        %v1296 = vsel %vm1118, %v1279, 0
        %v1299 = vsel %vm1118, %v1280, 0
        %1301 = vmatprep.subr.mxu0 0.0
        %1302 = vmatpush1.msra.mxu0 %v339
        %1303 = vmatprep.subr.mxu0 0.0
        %1304 = vmatpush1.msra.mxu0 %v345
        %1305 = vmatprep.subr.mxu0 0.0
        %1306 = vmatpush1.msra.mxu0 0.0
        %1307 = vmatprep.subr.mxu0 0.0
        %1308 = vmatpush1.msra.mxu0 0.0
        %1309 = vmatprep.subr.mxu0 0.0
        %1310 = vmatpush1.msra.mxu0 0.0
        %1311 = vmatprep.subr.mxu0 0.0
        %1312 = vmatpush1.msra.mxu0 0.0
        %1313 = vmatprep.subr.mxu0 0.0
        %1314 = vmatpush1.msra.mxu0 0.0
        %1315 = vmatprep.subr.mxu0 0.0
        %1316 = vmatpush1.msra.mxu0 0.0
        %1317 = vmatprep.subr.mxu0 0.0
        %1318 = vmatpush1.msra.mxu0 0.0
        %1319 = vmatprep.subr.mxu0 0.0
        %1320 = vmatpush1.msra.mxu0 0.0
        %1321 = vmatprep.subr.mxu0 0.0
        %1322 = vmatpush1.msra.mxu0 0.0
        %1323 = vmatprep.subr.mxu0 0.0
        %1324 = vmatpush1.msra.mxu0 0.0
        %1325 = vmatprep.subr.mxu0 0.0
        %1326 = vmatpush1.msra.mxu0 0.0
        %1327 = vmatprep.subr.mxu0 0.0
        %1328 = vmatpush1.msra.mxu0 0.0
        %1329 = vmatprep.subr.mxu0 0.0
        %1330 = vmatpush1.msra.mxu0 0.0
        %1331 = vmatprep.subr.mxu0 0.0
        %1332 = vmatpush1.msra.mxu0 0.0
        %1333 = vmatprep.subr.mxu0 0.0
        %1334 = vmatpush1.msra.mxu0 0.0
        %1335 = vmatprep.subr.mxu0 0.0
        %1336 = vmatpush1.msra.mxu0 0.0
        %1337 = vmatprep.subr.mxu0 0.0
        %1338 = vmatpush1.msra.mxu0 0.0
        %1339 = vmatprep.subr.mxu0 0.0
        %1340 = vmatpush1.msra.mxu0 0.0
        %1341 = vmatprep.subr.mxu0 0.0
        %1342 = vmatpush1.msra.mxu0 0.0
        %1343 = vmatprep.subr.mxu0 0.0
        %1344 = vmatpush1.msra.mxu0 0.0
        %1345 = vmatprep.subr.mxu0 0.0
        %1346 = vmatpush1.msra.mxu0 0.0
        %1347 = vmatprep.subr.mxu0 0.0
        %1348 = vmatpush1.msra.mxu0 0.0
        %1349 = vmatprep.subr.mxu0 0.0
        %1350 = vmatpush1.msra.mxu0 0.0
        %1351 = vmatprep.subr.mxu0 0.0
        %1352 = vmatpush1.msra.mxu0 0.0
        %1353 = vmatprep.subr.mxu0 0.0
        %1354 = vmatpush1.msra.mxu0 0.0
        %1355 = vmatprep.subr.mxu0 0.0
        %1356 = vmatpush1.msra.mxu0 0.0
        %1357 = vmatprep.subr.mxu0 0.0
        %1358 = vmatpush1.msra.mxu0 0.0
        %1359 = vmatprep.subr.mxu0 0.0
        %1360 = vmatpush1.msra.mxu0 0.0
        %1361 = vmatprep.subr.mxu0 0.0
        %1362 = vmatpush1.msra.mxu0 0.0
        %1363 = vmatprep.subr.mxu0 0.0
        %1364 = vmatpush1.msra.mxu0 0.0
        %1365 = vmatprep.mubr.f32.mxu0 0.0
        %1366 = vmatmul.mubr.f32.gmra.mrb[0].mxu0 %v1296
        %v1367 = vpop.f32.mrb[0].mxu0
        %v1368 = vadd.f32 0.0, %v1367
        %v1369 = vpop.f32.mrb[0].mxu0
        %1370 = vmatprep.mubr.f32.mxu0 0.0
        %1371 = vmatmul.mubr.f32.gmra.mrb[0].mxu0 %v1299
        %v1372 = vpop.f32.mrb[0].mxu0
        %v1373 = vadd.f32 0.0, %v1372
        %v1374 = vpop.f32.mrb[0].mxu0
        %1375 = vdwg.mxu0
        %v1377 = vsel %vm1118, %v1281, 0
        %v1380 = vsel %vm1118, %v1282, 0
        %1382 = vmatprep.subr.mxu0 0.0
        %1383 = vmatpush1.msra.mxu0 %v380
        %1384 = vmatprep.subr.mxu0 0.0
        %1385 = vmatpush1.msra.mxu0 %v382
        %1386 = vmatprep.subr.mxu0 0.0
        %1387 = vmatpush1.msra.mxu0 0.0
        %1388 = vmatprep.subr.mxu0 0.0
        %1389 = vmatpush1.msra.mxu0 0.0
        %1390 = vmatprep.subr.mxu0 0.0
        %1391 = vmatpush1.msra.mxu0 0.0
        %1392 = vmatprep.subr.mxu0 0.0
        %1393 = vmatpush1.msra.mxu0 0.0
        %1394 = vmatprep.subr.mxu0 0.0
        %1395 = vmatpush1.msra.mxu0 0.0
        %1396 = vmatprep.subr.mxu0 0.0
        %1397 = vmatpush1.msra.mxu0 0.0
        %1398 = vmatprep.subr.mxu0 0.0
        %1399 = vmatpush1.msra.mxu0 0.0
        %1400 = vmatprep.subr.mxu0 0.0
        %1401 = vmatpush1.msra.mxu0 0.0
        %1402 = vmatprep.subr.mxu0 0.0
        %1403 = vmatpush1.msra.mxu0 0.0
        %1404 = vmatprep.subr.mxu0 0.0
        %1405 = vmatpush1.msra.mxu0 0.0
        %1406 = vmatprep.subr.mxu0 0.0
        %1407 = vmatpush1.msra.mxu0 0.0
        %1408 = vmatprep.subr.mxu0 0.0
        %1409 = vmatpush1.msra.mxu0 0.0
        %1410 = vmatprep.subr.mxu0 0.0
        %1411 = vmatpush1.msra.mxu0 0.0
        %1412 = vmatprep.subr.mxu0 0.0
        %1413 = vmatpush1.msra.mxu0 0.0
        %1414 = vmatprep.subr.mxu0 0.0
        %1415 = vmatpush1.msra.mxu0 0.0
        %1416 = vmatprep.subr.mxu0 0.0
        %1417 = vmatpush1.msra.mxu0 0.0
        %1418 = vmatprep.subr.mxu0 0.0
        %1419 = vmatpush1.msra.mxu0 0.0
        %1420 = vmatprep.subr.mxu0 0.0
        %1421 = vmatpush1.msra.mxu0 0.0
        %1422 = vmatprep.subr.mxu0 0.0
        %1423 = vmatpush1.msra.mxu0 0.0
        %1424 = vmatprep.subr.mxu0 0.0
        %1425 = vmatpush1.msra.mxu0 0.0
        %1426 = vmatprep.subr.mxu0 0.0
        %1427 = vmatpush1.msra.mxu0 0.0
        %1428 = vmatprep.subr.mxu0 0.0
        %1429 = vmatpush1.msra.mxu0 0.0
        %1430 = vmatprep.subr.mxu0 0.0
        %1431 = vmatpush1.msra.mxu0 0.0
        %1432 = vmatprep.subr.mxu0 0.0
        %1433 = vmatpush1.msra.mxu0 0.0
        %1434 = vmatprep.subr.mxu0 0.0
        %1435 = vmatpush1.msra.mxu0 0.0
        %1436 = vmatprep.subr.mxu0 0.0
        %1437 = vmatpush1.msra.mxu0 0.0
        %1438 = vmatprep.subr.mxu0 0.0
        %1439 = vmatpush1.msra.mxu0 0.0
        %1440 = vmatprep.subr.mxu0 0.0
        %1441 = vmatpush1.msra.mxu0 0.0
        %1442 = vmatprep.subr.mxu0 0.0
        %1443 = vmatpush1.msra.mxu0 0.0
        %1444 = vmatprep.subr.mxu0 0.0
        %1445 = vmatpush1.msra.mxu0 0.0
        %1446 = vmatprep.mubr.f32.mxu0 0.0
        %1447 = vmatmul.mubr.f32.gmra.mrb[0].mxu0 %v1377
        %v1448 = vpop.f32.mrb[0].mxu0
        %v1449 = vadd.f32 0.0, %v1448
        %v1450 = vpop.f32.mrb[0].mxu0
        %1451 = vmatprep.mubr.f32.mxu0 0.0
        %1452 = vmatmul.mubr.f32.gmra.mrb[0].mxu0 %v1380
        %v1453 = vpop.f32.mrb[0].mxu0
        %v1454 = vadd.f32 0.0, %v1453
        %v1455 = vpop.f32.mrb[0].mxu0
        %1456 = vdwg.mxu0
        %v1458 = vsel %vm1118, %v1283, 0
        %v1461 = vsel %vm1118, %v1284, 0
        %1463 = vmatprep.subr.mxu0 0.0
        %1464 = vmatpush1.msra.mxu0 %v386
        %1465 = vmatprep.subr.mxu0 0.0
        %1466 = vmatpush1.msra.mxu0 %v388
        %1467 = vmatprep.subr.mxu0 0.0
        %1468 = vmatpush1.msra.mxu0 0.0
        %1469 = vmatprep.subr.mxu0 0.0
        %1470 = vmatpush1.msra.mxu0 0.0
        %1471 = vmatprep.subr.mxu0 0.0
        %1472 = vmatpush1.msra.mxu0 0.0
        %1473 = vmatprep.subr.mxu0 0.0
        %1474 = vmatpush1.msra.mxu0 0.0
        %1475 = vmatprep.subr.mxu0 0.0
        %1476 = vmatpush1.msra.mxu0 0.0
        %1477 = vmatprep.subr.mxu0 0.0
        %1478 = vmatpush1.msra.mxu0 0.0
        %1479 = vmatprep.subr.mxu0 0.0
        %1480 = vmatpush1.msra.mxu0 0.0
        %1481 = vmatprep.subr.mxu0 0.0
        %1482 = vmatpush1.msra.mxu0 0.0
        %1483 = vmatprep.subr.mxu0 0.0
        %1484 = vmatpush1.msra.mxu0 0.0
        %1485 = vmatprep.subr.mxu0 0.0
        %1486 = vmatpush1.msra.mxu0 0.0
        %1487 = vmatprep.subr.mxu0 0.0
        %1488 = vmatpush1.msra.mxu0 0.0
        %1489 = vmatprep.subr.mxu0 0.0
        %1490 = vmatpush1.msra.mxu0 0.0
        %1491 = vmatprep.subr.mxu0 0.0
        %1492 = vmatpush1.msra.mxu0 0.0
        %1493 = vmatprep.subr.mxu0 0.0
        %1494 = vmatpush1.msra.mxu0 0.0
        %1495 = vmatprep.subr.mxu0 0.0
        %1496 = vmatpush1.msra.mxu0 0.0
        %1497 = vmatprep.subr.mxu0 0.0
        %1498 = vmatpush1.msra.mxu0 0.0
        %1499 = vmatprep.subr.mxu0 0.0
        %1500 = vmatpush1.msra.mxu0 0.0
        %1501 = vmatprep.subr.mxu0 0.0
        %1502 = vmatpush1.msra.mxu0 0.0
        %1503 = vmatprep.subr.mxu0 0.0
        %1504 = vmatpush1.msra.mxu0 0.0
        %1505 = vmatprep.subr.mxu0 0.0
        %1506 = vmatpush1.msra.mxu0 0.0
        %1507 = vmatprep.subr.mxu0 0.0
        %1508 = vmatpush1.msra.mxu0 0.0
        %1509 = vmatprep.subr.mxu0 0.0
        %1510 = vmatpush1.msra.mxu0 0.0
        %1511 = vmatprep.subr.mxu0 0.0
        %1512 = vmatpush1.msra.mxu0 0.0
        %1513 = vmatprep.subr.mxu0 0.0
        %1514 = vmatpush1.msra.mxu0 0.0
        %1515 = vmatprep.subr.mxu0 0.0
        %1516 = vmatpush1.msra.mxu0 0.0
        %1517 = vmatprep.subr.mxu0 0.0
        %1518 = vmatpush1.msra.mxu0 0.0
        %1519 = vmatprep.subr.mxu0 0.0
        %1520 = vmatpush1.msra.mxu0 0.0
        %1521 = vmatprep.subr.mxu0 0.0
        %1522 = vmatpush1.msra.mxu0 0.0
        %1523 = vmatprep.subr.mxu0 0.0
        %1524 = vmatpush1.msra.mxu0 0.0
        %1525 = vmatprep.subr.mxu0 0.0
        %1526 = vmatpush1.msra.mxu0 0.0
        %1527 = vmatprep.mubr.f32.mxu0 0.0
        %1528 = vmatmul.mubr.f32.gmra.mrb[0].mxu0 %v1458
        %v1529 = vpop.f32.mrb[0].mxu0
        %v1530 = vadd.f32 0.0, %v1529
        %v1531 = vpop.f32.mrb[0].mxu0
        %1532 = vmatprep.mubr.f32.mxu0 0.0
        %1533 = vmatmul.mubr.f32.gmra.mrb[0].mxu0 %v1461
        %v1534 = vpop.f32.mrb[0].mxu0
        %v1535 = vadd.f32 0.0, %v1534
        %v1536 = vpop.f32.mrb[0].mxu0
        %1537 = vdwg.mxu0
        %v1539 = vsel %vm1118, %v1285, 0
        %v1542 = vsel %vm1118, %v1286, 0
        %1544 = vmatprep.subr.mxu0 0.0
        %1545 = vmatpush1.msra.mxu0 %v392
        %1546 = vmatprep.subr.mxu0 0.0
        %1547 = vmatpush1.msra.mxu0 %v394
        %1548 = vmatprep.subr.mxu0 0.0
        %1549 = vmatpush1.msra.mxu0 0.0
        %1550 = vmatprep.subr.mxu0 0.0
        %1551 = vmatpush1.msra.mxu0 0.0
        %1552 = vmatprep.subr.mxu0 0.0
        %1553 = vmatpush1.msra.mxu0 0.0
        %1554 = vmatprep.subr.mxu0 0.0
        %1555 = vmatpush1.msra.mxu0 0.0
        %1556 = vmatprep.subr.mxu0 0.0
        %1557 = vmatpush1.msra.mxu0 0.0
        %1558 = vmatprep.subr.mxu0 0.0
        %1559 = vmatpush1.msra.mxu0 0.0
        %1560 = vmatprep.subr.mxu0 0.0
        %1561 = vmatpush1.msra.mxu0 0.0
        %1562 = vmatprep.subr.mxu0 0.0
        %1563 = vmatpush1.msra.mxu0 0.0
        %1564 = vmatprep.subr.mxu0 0.0
        %1565 = vmatpush1.msra.mxu0 0.0
        %1566 = vmatprep.subr.mxu0 0.0
        %1567 = vmatpush1.msra.mxu0 0.0
        %1568 = vmatprep.subr.mxu0 0.0
        %1569 = vmatpush1.msra.mxu0 0.0
        %1570 = vmatprep.subr.mxu0 0.0
        %1571 = vmatpush1.msra.mxu0 0.0
        %1572 = vmatprep.subr.mxu0 0.0
        %1573 = vmatpush1.msra.mxu0 0.0
        %1574 = vmatprep.subr.mxu0 0.0
        %1575 = vmatpush1.msra.mxu0 0.0
        %1576 = vmatprep.subr.mxu0 0.0
        %1577 = vmatpush1.msra.mxu0 0.0
        %1578 = vmatprep.subr.mxu0 0.0
        %1579 = vmatpush1.msra.mxu0 0.0
        %1580 = vmatprep.subr.mxu0 0.0
        %1581 = vmatpush1.msra.mxu0 0.0
        %1582 = vmatprep.subr.mxu0 0.0
        %1583 = vmatpush1.msra.mxu0 0.0
        %1584 = vmatprep.subr.mxu0 0.0
        %1585 = vmatpush1.msra.mxu0 0.0
        %1586 = vmatprep.subr.mxu0 0.0
        %1587 = vmatpush1.msra.mxu0 0.0
        %1588 = vmatprep.subr.mxu0 0.0
        %1589 = vmatpush1.msra.mxu0 0.0
        %1590 = vmatprep.subr.mxu0 0.0
        %1591 = vmatpush1.msra.mxu0 0.0
        %1592 = vmatprep.subr.mxu0 0.0
        %1593 = vmatpush1.msra.mxu0 0.0
        %1594 = vmatprep.subr.mxu0 0.0
        %1595 = vmatpush1.msra.mxu0 0.0
        %1596 = vmatprep.subr.mxu0 0.0
        %1597 = vmatpush1.msra.mxu0 0.0
        %1598 = vmatprep.subr.mxu0 0.0
        %1599 = vmatpush1.msra.mxu0 0.0
        %1600 = vmatprep.subr.mxu0 0.0
        %1601 = vmatpush1.msra.mxu0 0.0
        %1602 = vmatprep.subr.mxu0 0.0
        %1603 = vmatpush1.msra.mxu0 0.0
        %1604 = vmatprep.subr.mxu0 0.0
        %1605 = vmatpush1.msra.mxu0 0.0
        %1606 = vmatprep.subr.mxu0 0.0
        %1607 = vmatpush1.msra.mxu0 0.0
        %1608 = vmatprep.mubr.f32.mxu0 0.0
        %1609 = vmatmul.mubr.f32.gmra.mrb[0].mxu0 %v1539
        %v1610 = vpop.f32.mrb[0].mxu0
        %v1611 = vadd.f32 0.0, %v1610
        %v1612 = vpop.f32.mrb[0].mxu0
        %1613 = vmatprep.mubr.f32.mxu0 0.0
        %1614 = vmatmul.mubr.f32.gmra.mrb[0].mxu0 %v1542
        %v1615 = vpop.f32.mrb[0].mxu0
        %v1616 = vadd.f32 0.0, %v1615
        %v1617 = vpop.f32.mrb[0].mxu0
        %1618 = vdwg.mxu0
        %v1620 = vsel %vm1118, %v1287, 0
        %v1623 = vsel %vm1118, %v1288, 0
        %1625 = vmatprep.subr.mxu0 0.0
        %1626 = vmatpush1.msra.mxu0 %v398
        %1627 = vmatprep.subr.mxu0 0.0
        %1628 = vmatpush1.msra.mxu0 %v400
        %1629 = vmatprep.subr.mxu0 0.0
        %1630 = vmatpush1.msra.mxu0 0.0
        %1631 = vmatprep.subr.mxu0 0.0
        %1632 = vmatpush1.msra.mxu0 0.0
        %1633 = vmatprep.subr.mxu0 0.0
        %1634 = vmatpush1.msra.mxu0 0.0
        %1635 = vmatprep.subr.mxu0 0.0
        %1636 = vmatpush1.msra.mxu0 0.0
        %1637 = vmatprep.subr.mxu0 0.0
        %1638 = vmatpush1.msra.mxu0 0.0
        %1639 = vmatprep.subr.mxu0 0.0
        %1640 = vmatpush1.msra.mxu0 0.0
        %1641 = vmatprep.subr.mxu0 0.0
        %1642 = vmatpush1.msra.mxu0 0.0
        %1643 = vmatprep.subr.mxu0 0.0
        %1644 = vmatpush1.msra.mxu0 0.0
        %1645 = vmatprep.subr.mxu0 0.0
        %1646 = vmatpush1.msra.mxu0 0.0
        %1647 = vmatprep.subr.mxu0 0.0
        %1648 = vmatpush1.msra.mxu0 0.0
        %1649 = vmatprep.subr.mxu0 0.0
        %1650 = vmatpush1.msra.mxu0 0.0
        %1651 = vmatprep.subr.mxu0 0.0
        %1652 = vmatpush1.msra.mxu0 0.0
        %1653 = vmatprep.subr.mxu0 0.0
        %1654 = vmatpush1.msra.mxu0 0.0
        %1655 = vmatprep.subr.mxu0 0.0
        %1656 = vmatpush1.msra.mxu0 0.0
        %1657 = vmatprep.subr.mxu0 0.0
        %1658 = vmatpush1.msra.mxu0 0.0
        %1659 = vmatprep.subr.mxu0 0.0
        %1660 = vmatpush1.msra.mxu0 0.0
        %1661 = vmatprep.subr.mxu0 0.0
        %1662 = vmatpush1.msra.mxu0 0.0
        %1663 = vmatprep.subr.mxu0 0.0
        %1664 = vmatpush1.msra.mxu0 0.0
        %1665 = vmatprep.subr.mxu0 0.0
        %1666 = vmatpush1.msra.mxu0 0.0
        %1667 = vmatprep.subr.mxu0 0.0
        %1668 = vmatpush1.msra.mxu0 0.0
        %1669 = vmatprep.subr.mxu0 0.0
        %1670 = vmatpush1.msra.mxu0 0.0
        %1671 = vmatprep.subr.mxu0 0.0
        %1672 = vmatpush1.msra.mxu0 0.0
        %1673 = vmatprep.subr.mxu0 0.0
        %1674 = vmatpush1.msra.mxu0 0.0
        %1675 = vmatprep.subr.mxu0 0.0
        %1676 = vmatpush1.msra.mxu0 0.0
        %1677 = vmatprep.subr.mxu0 0.0
        %1678 = vmatpush1.msra.mxu0 0.0
        %1679 = vmatprep.subr.mxu0 0.0
        %1680 = vmatpush1.msra.mxu0 0.0
        %1681 = vmatprep.subr.mxu0 0.0
        %1682 = vmatpush1.msra.mxu0 0.0
        %1683 = vmatprep.subr.mxu0 0.0
        %1684 = vmatpush1.msra.mxu0 0.0
        %1685 = vmatprep.subr.mxu0 0.0
        %1686 = vmatpush1.msra.mxu0 0.0
        %1687 = vmatprep.subr.mxu0 0.0
        %1688 = vmatpush1.msra.mxu0 0.0
        %1689 = vmatprep.mubr.f32.mxu0 0.0
        %1690 = vmatmul.mubr.f32.gmra.mrb[0].mxu0 %v1620
        %v1691 = vpop.f32.mrb[0].mxu0
        %v1692 = vadd.f32 0.0, %v1691
        %v1693 = vpop.f32.mrb[0].mxu0
        %1694 = vmatprep.mubr.f32.mxu0 0.0
        %1695 = vmatmul.mubr.f32.gmra.mrb[0].mxu0 %v1623
        %v1696 = vpop.f32.mrb[0].mxu0
        %v1697 = vadd.f32 0.0, %v1696
        %v1698 = vpop.f32.mrb[0].mxu0
        %1699 = vdwg.mxu0
        %v1701 = vsel %vm1118, %v1289, 0
        %v1704 = vsel %vm1118, %v1290, 0
        %1706 = vmatprep.subr.mxu0 0.0
        %1707 = vmatpush1.msra.mxu0 %v404
        %1708 = vmatprep.subr.mxu0 0.0
        %1709 = vmatpush1.msra.mxu0 %v406
        %1710 = vmatprep.subr.mxu0 0.0
        %1711 = vmatpush1.msra.mxu0 0.0
        %1712 = vmatprep.subr.mxu0 0.0
        %1713 = vmatpush1.msra.mxu0 0.0
        %1714 = vmatprep.subr.mxu0 0.0
        %1715 = vmatpush1.msra.mxu0 0.0
        %1716 = vmatprep.subr.mxu0 0.0
        %1717 = vmatpush1.msra.mxu0 0.0
        %1718 = vmatprep.subr.mxu0 0.0
        %1719 = vmatpush1.msra.mxu0 0.0
        %1720 = vmatprep.subr.mxu0 0.0
        %1721 = vmatpush1.msra.mxu0 0.0
        %1722 = vmatprep.subr.mxu0 0.0
        %1723 = vmatpush1.msra.mxu0 0.0
        %1724 = vmatprep.subr.mxu0 0.0
        %1725 = vmatpush1.msra.mxu0 0.0
        %1726 = vmatprep.subr.mxu0 0.0
        %1727 = vmatpush1.msra.mxu0 0.0
        %1728 = vmatprep.subr.mxu0 0.0
        %1729 = vmatpush1.msra.mxu0 0.0
        %1730 = vmatprep.subr.mxu0 0.0
        %1731 = vmatpush1.msra.mxu0 0.0
        %1732 = vmatprep.subr.mxu0 0.0
        %1733 = vmatpush1.msra.mxu0 0.0
        %1734 = vmatprep.subr.mxu0 0.0
        %1735 = vmatpush1.msra.mxu0 0.0
        %1736 = vmatprep.subr.mxu0 0.0
        %1737 = vmatpush1.msra.mxu0 0.0
        %1738 = vmatprep.subr.mxu0 0.0
        %1739 = vmatpush1.msra.mxu0 0.0
        %1740 = vmatprep.subr.mxu0 0.0
        %1741 = vmatpush1.msra.mxu0 0.0
        %1742 = vmatprep.subr.mxu0 0.0
        %1743 = vmatpush1.msra.mxu0 0.0
        %1744 = vmatprep.subr.mxu0 0.0
        %1745 = vmatpush1.msra.mxu0 0.0
        %1746 = vmatprep.subr.mxu0 0.0
        %1747 = vmatpush1.msra.mxu0 0.0
        %1748 = vmatprep.subr.mxu0 0.0
        %1749 = vmatpush1.msra.mxu0 0.0
        %1750 = vmatprep.subr.mxu0 0.0
        %1751 = vmatpush1.msra.mxu0 0.0
        %1752 = vmatprep.subr.mxu0 0.0
        %1753 = vmatpush1.msra.mxu0 0.0
        %1754 = vmatprep.subr.mxu0 0.0
        %1755 = vmatpush1.msra.mxu0 0.0
        %1756 = vmatprep.subr.mxu0 0.0
        %1757 = vmatpush1.msra.mxu0 0.0
        %1758 = vmatprep.subr.mxu0 0.0
        %1759 = vmatpush1.msra.mxu0 0.0
        %1760 = vmatprep.subr.mxu0 0.0
        %1761 = vmatpush1.msra.mxu0 0.0
        %1762 = vmatprep.subr.mxu0 0.0
        %1763 = vmatpush1.msra.mxu0 0.0
        %1764 = vmatprep.subr.mxu0 0.0
        %1765 = vmatpush1.msra.mxu0 0.0
        %1766 = vmatprep.subr.mxu0 0.0
        %1767 = vmatpush1.msra.mxu0 0.0
        %1768 = vmatprep.subr.mxu0 0.0
        %1769 = vmatpush1.msra.mxu0 0.0
        %1770 = vmatprep.mubr.f32.mxu0 0.0
        %1771 = vmatmul.mubr.f32.gmra.mrb[0].mxu0 %v1701
        %v1772 = vpop.f32.mrb[0].mxu0
        %v1773 = vadd.f32 0.0, %v1772
        %v1774 = vpop.f32.mrb[0].mxu0
        %1775 = vmatprep.mubr.f32.mxu0 0.0
        %1776 = vmatmul.mubr.f32.gmra.mrb[0].mxu0 %v1704
        %v1777 = vpop.f32.mrb[0].mxu0
        %v1778 = vadd.f32 0.0, %v1777
        %v1779 = vpop.f32.mrb[0].mxu0
        %1780 = vdwg.mxu0
        %v1782 = vsel %vm1118, %v1291, 0
        %v1785 = vsel %vm1118, %v1292, 0
        %1787 = vmatprep.subr.mxu0 0.0
        %1788 = vmatpush1.msra.mxu0 %v410
        %1789 = vmatprep.subr.mxu0 0.0
        %1790 = vmatpush1.msra.mxu0 %v412
        %1791 = vmatprep.subr.mxu0 0.0
        %1792 = vmatpush1.msra.mxu0 0.0
        %1793 = vmatprep.subr.mxu0 0.0
        %1794 = vmatpush1.msra.mxu0 0.0
        %1795 = vmatprep.subr.mxu0 0.0
        %1796 = vmatpush1.msra.mxu0 0.0
        %1797 = vmatprep.subr.mxu0 0.0
        %1798 = vmatpush1.msra.mxu0 0.0
        %1799 = vmatprep.subr.mxu0 0.0
        %1800 = vmatpush1.msra.mxu0 0.0
        %1801 = vmatprep.subr.mxu0 0.0
        %1802 = vmatpush1.msra.mxu0 0.0
        %1803 = vmatprep.subr.mxu0 0.0
        %1804 = vmatpush1.msra.mxu0 0.0
        %1805 = vmatprep.subr.mxu0 0.0
        %1806 = vmatpush1.msra.mxu0 0.0
        %1807 = vmatprep.subr.mxu0 0.0
        %1808 = vmatpush1.msra.mxu0 0.0
        %1809 = vmatprep.subr.mxu0 0.0
        %1810 = vmatpush1.msra.mxu0 0.0
        %1811 = vmatprep.subr.mxu0 0.0
        %1812 = vmatpush1.msra.mxu0 0.0
        %1813 = vmatprep.subr.mxu0 0.0
        %1814 = vmatpush1.msra.mxu0 0.0
        %1815 = vmatprep.subr.mxu0 0.0
        %1816 = vmatpush1.msra.mxu0 0.0
        %1817 = vmatprep.subr.mxu0 0.0
        %1818 = vmatpush1.msra.mxu0 0.0
        %1819 = vmatprep.subr.mxu0 0.0
        %1820 = vmatpush1.msra.mxu0 0.0
        %1821 = vmatprep.subr.mxu0 0.0
        %1822 = vmatpush1.msra.mxu0 0.0
        %1823 = vmatprep.subr.mxu0 0.0
        %1824 = vmatpush1.msra.mxu0 0.0
        %1825 = vmatprep.subr.mxu0 0.0
        %1826 = vmatpush1.msra.mxu0 0.0
        %1827 = vmatprep.subr.mxu0 0.0
        %1828 = vmatpush1.msra.mxu0 0.0
        %1829 = vmatprep.subr.mxu0 0.0
        %1830 = vmatpush1.msra.mxu0 0.0
        %1831 = vmatprep.subr.mxu0 0.0
        %1832 = vmatpush1.msra.mxu0 0.0
        %1833 = vmatprep.subr.mxu0 0.0
        %1834 = vmatpush1.msra.mxu0 0.0
        %1835 = vmatprep.subr.mxu0 0.0
        %1836 = vmatpush1.msra.mxu0 0.0
        %1837 = vmatprep.subr.mxu0 0.0
        %1838 = vmatpush1.msra.mxu0 0.0
        %1839 = vmatprep.subr.mxu0 0.0
        %1840 = vmatpush1.msra.mxu0 0.0
        %1841 = vmatprep.subr.mxu0 0.0
        %1842 = vmatpush1.msra.mxu0 0.0
        %1843 = vmatprep.subr.mxu0 0.0
        %1844 = vmatpush1.msra.mxu0 0.0
        %1845 = vmatprep.subr.mxu0 0.0
        %1846 = vmatpush1.msra.mxu0 0.0
        %1847 = vmatprep.subr.mxu0 0.0
        %1848 = vmatpush1.msra.mxu0 0.0
        %1849 = vmatprep.subr.mxu0 0.0
        %1850 = vmatpush1.msra.mxu0 0.0
        %1851 = vmatprep.mubr.f32.mxu0 0.0
        %1852 = vmatmul.mubr.f32.gmra.mrb[0].mxu0 %v1782
        %v1853 = vpop.f32.mrb[0].mxu0
        %v1854 = vadd.f32 0.0, %v1853
        %v1855 = vpop.f32.mrb[0].mxu0
        %1856 = vmatprep.mubr.f32.mxu0 0.0
        %1857 = vmatmul.mubr.f32.gmra.mrb[0].mxu0 %v1785
        %v1858 = vpop.f32.mrb[0].mxu0
        %v1859 = vadd.f32 0.0, %v1858
        %v1860 = vpop.f32.mrb[0].mxu0
        %1861 = vdwg.mxu0
        %v1863 = vsel %vm1118, %v1293, 0
        %v1866 = vsel %vm1118, %v1294, 0
        %1868 = vmatprep.subr.mxu0 0.0
        %1869 = vmatpush1.msra.mxu0 %v416
        %1870 = vmatprep.subr.mxu0 0.0
        %1871 = vmatpush1.msra.mxu0 %v418
        %1872 = vmatprep.subr.mxu0 0.0
        %1873 = vmatpush1.msra.mxu0 0.0
        %1874 = vmatprep.subr.mxu0 0.0
        %1875 = vmatpush1.msra.mxu0 0.0
        %1876 = vmatprep.subr.mxu0 0.0
        %1877 = vmatpush1.msra.mxu0 0.0
        %1878 = vmatprep.subr.mxu0 0.0
        %1879 = vmatpush1.msra.mxu0 0.0
        %1880 = vmatprep.subr.mxu0 0.0
        %1881 = vmatpush1.msra.mxu0 0.0
        %1882 = vmatprep.subr.mxu0 0.0
        %1883 = vmatpush1.msra.mxu0 0.0
        %1884 = vmatprep.subr.mxu0 0.0
        %1885 = vmatpush1.msra.mxu0 0.0
        %1886 = vmatprep.subr.mxu0 0.0
        %1887 = vmatpush1.msra.mxu0 0.0
        %1888 = vmatprep.subr.mxu0 0.0
        %1889 = vmatpush1.msra.mxu0 0.0
        %1890 = vmatprep.subr.mxu0 0.0
        %1891 = vmatpush1.msra.mxu0 0.0
        %1892 = vmatprep.subr.mxu0 0.0
        %1893 = vmatpush1.msra.mxu0 0.0
        %1894 = vmatprep.subr.mxu0 0.0
        %1895 = vmatpush1.msra.mxu0 0.0
        %1896 = vmatprep.subr.mxu0 0.0
        %1897 = vmatpush1.msra.mxu0 0.0
        %1898 = vmatprep.subr.mxu0 0.0
        %1899 = vmatpush1.msra.mxu0 0.0
        %1900 = vmatprep.subr.mxu0 0.0
        %1901 = vmatpush1.msra.mxu0 0.0
        %1902 = vmatprep.subr.mxu0 0.0
        %1903 = vmatpush1.msra.mxu0 0.0
        %1904 = vmatprep.subr.mxu0 0.0
        %1905 = vmatpush1.msra.mxu0 0.0
        %1906 = vmatprep.subr.mxu0 0.0
        %1907 = vmatpush1.msra.mxu0 0.0
        %1908 = vmatprep.subr.mxu0 0.0
        %1909 = vmatpush1.msra.mxu0 0.0
        %1910 = vmatprep.subr.mxu0 0.0
        %1911 = vmatpush1.msra.mxu0 0.0
        %1912 = vmatprep.subr.mxu0 0.0
        %1913 = vmatpush1.msra.mxu0 0.0
        %1914 = vmatprep.subr.mxu0 0.0
        %1915 = vmatpush1.msra.mxu0 0.0
        %1916 = vmatprep.subr.mxu0 0.0
        %1917 = vmatpush1.msra.mxu0 0.0
        %1918 = vmatprep.subr.mxu0 0.0
        %1919 = vmatpush1.msra.mxu0 0.0
        %1920 = vmatprep.subr.mxu0 0.0
        %1921 = vmatpush1.msra.mxu0 0.0
        %1922 = vmatprep.subr.mxu0 0.0
        %1923 = vmatpush1.msra.mxu0 0.0
        %1924 = vmatprep.subr.mxu0 0.0
        %1925 = vmatpush1.msra.mxu0 0.0
        %1926 = vmatprep.subr.mxu0 0.0
        %1927 = vmatpush1.msra.mxu0 0.0
        %1928 = vmatprep.subr.mxu0 0.0
        %1929 = vmatpush1.msra.mxu0 0.0
        %1930 = vmatprep.subr.mxu0 0.0
        %1931 = vmatpush1.msra.mxu0 0.0
        %1932 = vmatprep.mubr.f32.mxu0 0.0
        %1933 = vmatmul.mubr.f32.gmra.mrb[0].mxu0 %v1863
        %v1934 = vpop.f32.mrb[0].mxu0
        %v1935 = vadd.f32 0.0, %v1934
        %v1936 = vpop.f32.mrb[0].mxu0
        %1937 = vmatprep.mubr.f32.mxu0 0.0
        %1938 = vmatmul.mubr.f32.gmra.mrb[0].mxu0 %v1866
        %v1939 = vpop.f32.mrb[0].mxu0
        %v1940 = vadd.f32 0.0, %v1939
        %v1941 = vpop.f32.mrb[0].mxu0
        %1942 = vdwg.mxu0
        %1945 = vrot.lane.b32.xlu0 %v1449, 8
        %v1946 = vpop.permute.xlu0 %1945
        %1947 = vrot.lane.b32.xlu0 %v1454, 8
        %v1948 = vpop.permute.xlu0 %1947
        %1953 = vrot.lane.b32.xlu0 %v1530, 16
        %v1954 = vpop.permute.xlu0 %1953
        %1955 = vrot.lane.b32.xlu0 %v1535, 16
        %v1956 = vpop.permute.xlu0 %1955
        %1961 = vrot.lane.b32.xlu0 %v1611, 24
        %v1962 = vpop.permute.xlu0 %1961
        %1963 = vrot.lane.b32.xlu0 %v1616, 24
        %v1964 = vpop.permute.xlu0 %1963
        %1969 = vrot.lane.b32.xlu0 %v1692, 32
        %v1970 = vpop.permute.xlu0 %1969
        %1971 = vrot.lane.b32.xlu0 %v1697, 32
        %v1972 = vpop.permute.xlu0 %1971
        %1977 = vrot.lane.b32.xlu0 %v1773, 40
        %v1978 = vpop.permute.xlu0 %1977
        %1979 = vrot.lane.b32.xlu0 %v1778, 40
        %v1980 = vpop.permute.xlu0 %1979
        %1985 = vrot.lane.b32.xlu0 %v1854, 48
        %v1986 = vpop.permute.xlu0 %1985
        %1987 = vrot.lane.b32.xlu0 %v1859, 48
        %v1988 = vpop.permute.xlu0 %1987
        %1993 = vrot.lane.b32.xlu0 %v1935, 56
        %v1994 = vpop.permute.xlu0 %1993
        %1995 = vrot.lane.b32.xlu0 %v1940, 56
        %v1996 = vpop.permute.xlu0 %1995
        %v1999 = vsel %vm425, %v1368, %v1946
        %v2000 = vsel %vm425, %v1373, %v1948
        %v2001 = vsel %vm1118, %v1999, %v1954
        %v2002 = vsel %vm1118, %v2000, %v1956
        %vm2003 = vcmask 195584
        %v2004 = vsel %vm2003, %v2001, %v1962
        %v2005 = vsel %vm2003, %v2002, %v1964
        %vm2006 = vcmask 261120
        %v2007 = vsel %vm2006, %v2004, %v1970
        %v2008 = vsel %vm2006, %v2005, %v1972
        %vm2009 = vcmask 326656
        %v2010 = vsel %vm2009, %v2007, %v1978
        %v2011 = vsel %vm2009, %v2008, %v1980
        %vm2012 = vcmask 392192
        %v2013 = vsel %vm2012, %v2010, %v1986
        %v2014 = vsel %vm2012, %v2011, %v1988
        %vm2015 = vcmask 457728
        %v2016 = vsel %vm2015, %v2013, %v1994
        %v2017 = vsel %vm2015, %v2014, %v1996
        %v2018 = vld [vmem:[#allocation7] sm:$0xff]
        %v2019 = vld [vmem:[#allocation7 + $0x8] sm:$0xff]
        %v2020 = vld [vmem:[#allocation7 + $0x10] sm:$0xff]
        %v2021 = vld [vmem:[#allocation7 + $0x18] sm:$0xff]
        %v2022 = vld [vmem:[#allocation7 + $0x20] sm:$0xff]
        %v2023 = vld [vmem:[#allocation7 + $0x28] sm:$0xff]
        %v2024 = vld [vmem:[#allocation7 + $0x30] sm:$0xff]
        %v2025 = vld [vmem:[#allocation7 + $0x38] sm:$0xff]
        %v2026 = vld [vmem:[%s3] sm:$0x1]
        %v2028 = vlaneseq
        %v2029 = vshrl.u32 %v2028, 7
        %v2030 = vsub.s32 0, %v2029
        %v2031 = vrot.slane %v2026, %v2030
        %v2034 = vsel %vm263, %v2016, 0
        %v2037 = vsel %vm263, %v2017, 0
        %2039 = vmatprep.subr.mxu0 0.0
        %2040 = vmatpush1.msra.mxu0 %v2018
        %2041 = vmatprep.subr.mxu0 0.0
        %2042 = vmatpush1.msra.mxu0 %v2019
        %2043 = vmatprep.subr.mxu0 0.0
        %2044 = vmatpush1.msra.mxu0 %v2020
        %2045 = vmatprep.subr.mxu0 0.0
        %2046 = vmatpush1.msra.mxu0 %v2021
        %2047 = vmatprep.subr.mxu0 0.0
        %2048 = vmatpush1.msra.mxu0 %v2022
        %2049 = vmatprep.subr.mxu0 0.0
        %2050 = vmatpush1.msra.mxu0 %v2023
        %2051 = vmatprep.subr.mxu0 0.0
        %2052 = vmatpush1.msra.mxu0 %v2024
        %2053 = vmatprep.subr.mxu0 0.0
        %2054 = vmatpush1.msra.mxu0 %v2025
        %2055 = vmatprep.subr.mxu0 0.0
        %2056 = vmatpush1.msra.mxu0 0.0
        %2057 = vmatprep.subr.mxu0 0.0
        %2058 = vmatpush1.msra.mxu0 0.0
        %2059 = vmatprep.subr.mxu0 0.0
        %2060 = vmatpush1.msra.mxu0 0.0
        %2061 = vmatprep.subr.mxu0 0.0
        %2062 = vmatpush1.msra.mxu0 0.0
        %2063 = vmatprep.subr.mxu0 0.0
        %2064 = vmatpush1.msra.mxu0 0.0
        %2065 = vmatprep.subr.mxu0 0.0
        %2066 = vmatpush1.msra.mxu0 0.0
        %2067 = vmatprep.subr.mxu0 0.0
        %2068 = vmatpush1.msra.mxu0 0.0
        %2069 = vmatprep.subr.mxu0 0.0
        %2070 = vmatpush1.msra.mxu0 0.0
        %2071 = vmatprep.subr.mxu0 0.0
        %2072 = vmatpush1.msra.mxu0 0.0
        %2073 = vmatprep.subr.mxu0 0.0
        %2074 = vmatpush1.msra.mxu0 0.0
        %2075 = vmatprep.subr.mxu0 0.0
        %2076 = vmatpush1.msra.mxu0 0.0
        %2077 = vmatprep.subr.mxu0 0.0
        %2078 = vmatpush1.msra.mxu0 0.0
        %2079 = vmatprep.subr.mxu0 0.0
        %2080 = vmatpush1.msra.mxu0 0.0
        %2081 = vmatprep.subr.mxu0 0.0
        %2082 = vmatpush1.msra.mxu0 0.0
        %2083 = vmatprep.subr.mxu0 0.0
        %2084 = vmatpush1.msra.mxu0 0.0
        %2085 = vmatprep.subr.mxu0 0.0
        %2086 = vmatpush1.msra.mxu0 0.0
        %2087 = vmatprep.subr.mxu0 0.0
        %2088 = vmatpush1.msra.mxu0 0.0
        %2089 = vmatprep.subr.mxu0 0.0
        %2090 = vmatpush1.msra.mxu0 0.0
        %2091 = vmatprep.subr.mxu0 0.0
        %2092 = vmatpush1.msra.mxu0 0.0
        %2093 = vmatprep.subr.mxu0 0.0
        %2094 = vmatpush1.msra.mxu0 0.0
        %2095 = vmatprep.subr.mxu0 0.0
        %2096 = vmatpush1.msra.mxu0 0.0
        %2097 = vmatprep.subr.mxu0 0.0
        %2098 = vmatpush1.msra.mxu0 0.0
        %2099 = vmatprep.subr.mxu0 0.0
        %2100 = vmatpush1.msra.mxu0 0.0
        %2101 = vmatprep.subr.mxu0 0.0
        %2102 = vmatpush1.msra.mxu0 0.0
        %2103 = vmatprep.mubr.f32.mxu0 0.0
        %2104 = vmatmul.mubr.f32.gmra.mrb[0].mxu0 %v2034
        %v2105 = vpop.f32.mrb[0].mxu0
        %v2106 = vadd.f32 %v2031, %v2105
        %v2107 = vpop.f32.mrb[0].mxu0
        %2108 = vmatprep.mubr.f32.mxu0 0.0
        %2109 = vmatmul.mubr.f32.gmra.mrb[0].mxu0 %v2037
        %v2110 = vpop.f32.mrb[0].mxu0
        %v2111 = vadd.f32 %v2031, %v2110
        %v2112 = vpop.f32.mrb[0].mxu0
        %2113 = vdwg.mxu0
        %2114 = vst.msk [vmem:[%s244] sm:$0xff] %vm263, %v2106
        %2115 = vst.msk [vmem:[%s244 + $0x8] sm:$0xff] %vm263, %v2111
        %s2116 = sand.u32 %s119, 1
        %s2117 = scalar_lea.sflag [#allocation4], %s2116
        %s2118 = sand.u32 %s119, 1
        %s2119 = smul.addr %s2118, 16
        %s2120 = scalar_lea.vmem [#allocation8], %s2119
        // Predicated region
        $region49: #{tpu_custom_call.1} parent=35 // pred_check
          %p2121 = pneg %p129
        $region50: #{tpu_custom_call.1} parent=35 // pred_check_branch
          %2123 = sbr.rel (%p2121) target = $region52
        $region51: #{tpu_custom_call.1} parent=35 // pred_region
          %s2125 = ssub.s32 256, 256
          %2126 = vsyncadd %s2117, %s2125
          %s2127 = smul.addr %s22, 2
          %s2128 = smul.addr %s2127, 128
          %s2129 = scalar_lea.hbm %s4, %s2128
          %s2130 = sshll.u32 %s2120, 4
          %s2131 = int_to_ptr.vmem [resolvable:$true] %s2130
          %2136 = dma.vmem_to_hbm [thread:$0]  %s2131, 256, %s2129, %s2117, 128, 128, 8
        $region52: #{tpu_custom_call.1} parent=35 // pred_fallthru
          _
      $region36: #{tpu_custom_call.1} parent=5 // pred_fallthru
        _
      %p2137 = scmp.le.s32.totalorder 2, %s17
      // Predicated region
      $region53: #{tpu_custom_call.1} parent=5 // pred_check
        %p2138 = pneg %p2137
      $region54: #{tpu_custom_call.1} parent=5 // pred_check_branch
        %2140 = sbr.rel (%p2138) target = $region56
      $region55: #{tpu_custom_call.1} parent=5 // pred_region
        %s2141 = ssub.s32 %s17, 2
        // Predicated region
        $region57: #{tpu_custom_call.1} parent=55 // pred_check
          %p2142 = pneg %p135
        $region58: #{tpu_custom_call.1} parent=55 // pred_check_branch
          %2144 = sbr.rel (%p2142) target = $region60
        $region59: #{tpu_custom_call.1} parent=55 // pred_region
          %s2145 = sand.u32 %s120, 1
          %s2146 = scalar_lea.sflag [#allocation4], %s2145
          %s2147 = sand.u32 %s120, 1
          %s2148 = smul.addr %s2147, 16
          %s2149 = scalar_lea.vmem [#allocation8], %s2148
          %2150 = dma.done %s2146, 256
        $region60: #{tpu_custom_call.1} parent=55 // pred_fallthru
          _
      $region56: #{tpu_custom_call.1} parent=5 // pred_fallthru
        _
    $region6: #{tpu_custom_call.1} parent=1 // loop_footer
      %s21 = sadd.s32 1, %s17
    $region7: #{tpu_custom_call.1} parent=1 // loop_footer_branch
      %16 = sbr.rel target = $region3
    $region8: #{tpu_custom_call.1} parent=1 // loop_exit
      _
    %2151 = vsyncpa [#allocation3], 1
    %s2152 = scalar_lea.sflag [#allocation3], 1
    %2153 = vsyncpa %s2152, 1
    %2154 = vsyncpa [#allocation6], 1
    %2155 = vsyncpa [#allocation4], 1
    %s2156 = scalar_lea.sflag [#allocation4], 1
    %2157 = vsyncpa %s2156, 1

</llo_original>
